<compile_context>
chip_gen: v7x
topology: tpu7x:2x2x1
jax: 0.10.0
libtpu: 0.0.40
codegen_flags: <defaults>
</compile_context>

<pallas_src>
import functools

import jax
import jax.numpy as jnp
from jax.experimental import pallas as pl
from jax.experimental.pallas import tpu as pltpu


def _silu(x):
    # Exact SiLU (x * sigmoid(x)); executed once per batch tile, so exactness costs nothing.
    return x * (1.0 / (1.0 + jnp.exp(-x)))


def classifier_head_kernel(
    cls1_ref, cls2_ref, cls3_ref, cls4_ref, patch4_ref,
    w1_ref, b1_ref, w2_ref, b2_ref, w3_ref, b3_ref,
    out_ref, sum_acc,
    *, inv_s, seq_len, mask_last_block,
):
    s = pl.program_id(1)

    @pl.when(s == 0)
    def _():
        sum_acc[...] = jnp.zeros_like(sum_acc)

    # f32 running sum of this batch tile's patch tokens: [TB, TS, D] -> [TB, D].
    x = patch4_ref[...].astype(jnp.float32)
    if mask_last_block:
        # Ragged last S tile: rows >= seq_len hold undefined data -> zero them out.
        ts = x.shape[1]
        row = jax.lax.broadcasted_iota(jnp.int32, (1, ts, 1), 1)
        x = jnp.where(s * ts + row < seq_len, x, 0.0)
    sum_acc[...] += jnp.sum(x, axis=1)

    @pl.when(s == pl.num_programs(1) - 1)
    def _():
        D = cls1_ref.shape[1]
        wdt = w1_ref.dtype

        mean4 = (sum_acc[...] * inv_s).astype(wdt)

        # linear_input = concat([cls1..cls4, mean4], axis=1); layer 1 is computed as a sum
        # of partial matmuls against the five row-blocks of w1 (identical math, no concat).
        feats = (
            cls1_ref[...].astype(wdt), cls2_ref[...].astype(wdt),
            cls3_ref[...].astype(wdt), cls4_ref[...].astype(wdt), mean4,
        )
        h = b1_ref[...]                                       # [1, H] f32, broadcasts
        for k, f in enumerate(feats):
            h = h + jnp.dot(f, w1_ref[pl.ds(k * D, D), :],
                            preferred_element_type=jnp.float32)
        h = _silu(h)

        # Second layer + SiLU (bf16 operands, f32 accumulation).
        h = jnp.dot(h.astype(wdt), w2_ref[...],
                    preferred_element_type=jnp.float32) + b2_ref[...]
        h = _silu(h)

        # Final H -> 1 layer as VPU multiply + lane reduction (avoids an N=1 MXU matmul);
        # single write per batch tile.
        out = jnp.sum(h * w3_ref[...], axis=-1, keepdims=True) + b3_ref[...]
        out_ref[...] = out.astype(out_ref.dtype)


def _largest_divisor(n, candidates):
    for c in candidates:
        if c <= n and n % c == 0:
            return c
    return n


def _vmem_capacity_bytes():
    try:
        return int(pltpu.get_tpu_info().vmem_capacity_bytes)
    except Exception:
        return 64 * 1024 * 1024   # conservative fallback: v7x per-TensorCore VMEM


def classifier_head(cls1, cls2, cls3, cls4, patch4, params, *, tb=None, ts=None,
                    param_dtype=jnp.bfloat16):
    B, S, D = patch4.shape
    w1, b1, w2, b2, w3, b3 = params
    H = w2.shape[0]

    # Parameters: one-time cast to bf16 (fast MXU path, halves resident weight VMEM);
    # biases + the final H->1 row stay f32.  Activations (cls*, patch4) are streamed in
    # their native dtype -- no wrapper-side cast (that would cost a full extra HBM pass).
    w1 = w1.astype(param_dtype)
    w2 = w2.astype(param_dtype)
    b1 = b1.reshape(1, H).astype(jnp.float32)
    b2 = b2.reshape(1, H).astype(jnp.float32)
    w3_row = w3.reshape(1, H).astype(jnp.float32)
    b3 = b3.reshape(1, 1).astype(jnp.float32)

    vmem_cap = _vmem_capacity_bytes()
    p_isz = patch4.dtype.itemsize
    w_isz = jnp.dtype(param_dtype).itemsize
    c_isz = cls1.dtype.itemsize

    # --- tile selection: size the double-buffered patch4 slab to the chip's VMEM ---------
    patch_budget = min(32 << 20, int(0.35 * vmem_cap))
    if tb is None:
        tb = _largest_divisor(B, (256, 128, 64, 32, 16, 8))
        while tb > 8 and tb % 2 == 0 and 2 * tb * 8 * D * p_isz > patch_budget:
            tb //= 2
    if ts is None:
        min_mult = 16 if p_isz < 4 else 8     # bf16 packs 16 rows per sublane group
        max_ts = patch_budget // (2 * tb * D * p_isz)
        max_ts = max(min_mult, (max_ts // min_mult) * min_mult)
        ts = S if S <= max_ts else min(max_ts, 512)
    mask_last = (S % ts) != 0
    grid = (B // tb, pl.cdiv(S, ts))

    # --- VMEM budget from actual buffer math (clamped to 85% of physical VMEM) -----------
    def _need_bytes(single_buffer):
        pad = lambda n, m: ((n + m - 1) // m) * m
        patch = 2 * tb * pad(ts, 16) * pad(D, 128) * p_isz
        clsb = 4 * 2 * pad(tb, 8) * pad(D, 128) * c_isz
        wbuf = 1 if single_buffer else 2
        weights = wbuf * (pad(5 * D, 8) * pad(H, 128) + pad(H, 8) * pad(H, 128)) * w_isz
        small = wbuf * 4 * 8 * pad(H, 128) * 4
        outb = 2 * pad(tb, 8) * 128 * 4
        scratch = pad(tb, 8) * pad(D, 128) * 4
        return patch + clsb + weights + small + outb + scratch

    def _vmem_limit(single_buffer):
        need = _need_bytes(single_buffer)
        return min(int(0.85 * vmem_cap), max(2 * need + (8 << 20), 32 << 20))

    kernel = functools.partial(
        classifier_head_kernel, inv_s=1.0 / S, seq_len=S, mask_last_block=mask_last)

    def build(single_buffer_weights):
        def const_spec(shape):
            index_map = lambda b, s: (0,) * len(shape)
            if single_buffer_weights:
                # Constant index_map => DMA'd once and resident; single-buffer it so the
                # pipeline doesn't waste a second ~10 MiB copy of w1 (ViT-L scale).
                return pl.BlockSpec(shape, index_map, pipeline_mode=pl.Buffered(1))
            return pl.BlockSpec(shape, index_map)

        cls_spec = pl.BlockSpec((tb, D), lambda b, s: (b, 0))

        return pl.pallas_call(
            kernel,
            out_shape=jax.ShapeDtypeStruct((B, 1), jnp.float32),
            grid_spec=pltpu.PrefetchScalarGridSpec(
                num_scalar_prefetch=0,
                grid=grid,
                in_specs=[
                    cls_spec, cls_spec, cls_spec, cls_spec,
                    pl.BlockSpec((tb, ts, D), lambda b, s: (b, s, 0)),
                    const_spec((5 * D, H)),   # w1 (resident)
                    const_spec((1, H)),       # b1
                    const_spec((H, H)),       # w2 (resident)
                    const_spec((1, H)),       # b2
                    const_spec((1, H)),       # w3 row
                    const_spec((1, 1)),       # b3
                ],
                out_specs=pl.BlockSpec((tb, 1), lambda b, s: (b, 0)),
                scratch_shapes=[pltpu.VMEM((tb, D), jnp.float32)],
            ),
            compiler_params=pltpu.CompilerParams(
                # Batch tiles are independent -> "parallel" (shards across v7x's 2 TCs);
                # the S axis is a reduction into the resident accumulator -> "arbitrary".
                # TODO(synk): confirm the batch axis splits across both v7x TensorCores;
                # if not, use pltpu.CORE_PARALLEL on axis 0.
                dimension_semantics=("parallel", "arbitrary"),
                vmem_limit_bytes=_vmem_limit(single_buffer_weights),
            ),
        )

    args = (cls1, cls2, cls3, cls4, patch4, w1, b1, w2, b2, w3_row, b3)
    try:
        return build(True)(*args)
    except Exception:
        # pipeline_mode=pl.Buffered(1) may be unsupported by this Pallas build; retry with
        # default double-buffering (identical results, just spends more VMEM on weights).
        return build(False)(*args)


def init_mlp_params(key, dim_in, dim_hidden, dim_out):
    """Deterministic synthetic init for MLP(dim_in, dim_out, dim_hidden, num_layers=3)."""
    k1, k2, k3, k4, k5, k6 = jax.random.split(key, 6)
    w1 = jax.random.normal(k1, (dim_in, dim_hidden), jnp.float32) * 0.02
    b1 = jax.random.normal(k2, (1, dim_hidden), jnp.float32) * 0.02
    w2 = jax.random.normal(k3, (dim_hidden, dim_hidden), jnp.float32) * 0.02
    b2 = jax.random.normal(k4, (1, dim_hidden), jnp.float32) * 0.02
    w3 = jax.random.normal(k5, (dim_hidden, dim_out), jnp.float32) * 0.02
    b3 = jax.random.normal(k6, (1, dim_out), jnp.float32) * 0.02
    return (w1, b1, w2, b2, w3, b3)


def reference_head(cls1, cls2, cls3, cls4, patch4, params):
    w1, b1, w2, b2, w3, b3 = params
    feat = jnp.concatenate(
        [cls1, cls2, cls3, cls4, jnp.mean(patch4, axis=1)], axis=1
    )
    h = jax.nn.silu(feat @ w1 + b1)
    h = jax.nn.silu(h @ w2 + b2)
    return h @ w3 + b3


if __name__ == "__main__":
    # Small shapes consistent with the module structure:
    #   embed_dim D = 32 (ViT-L would be 1024), 4 intermediate layers, batch B = 2,
    #   S = 8 patch tokens per image.  MLP: (1+4)*D -> D -> D -> 1.
    B, S, D = 2, 8, 32
    key = jax.random.PRNGKey(0)
    kf, kp = jax.random.split(key)

    k_c1, k_c2, k_c3, k_c4, k_p4 = jax.random.split(kf, 5)
    cls1 = jax.random.normal(k_c1, (B, D), jnp.float32)
    cls2 = jax.random.normal(k_c2, (B, D), jnp.float32)
    cls3 = jax.random.normal(k_c3, (B, D), jnp.float32)
    cls4 = jax.random.normal(k_c4, (B, D), jnp.float32)
    patch4 = jax.random.normal(k_p4, (B, S, D), jnp.float32)

    params = init_mlp_params(kp, 5 * D, D, 1)

    out = classifier_head(cls1, cls2, cls3, cls4, patch4, params)
    out = jax.block_until_ready(out)

    ref = reference_head(cls1, cls2, cls3, cls4, patch4, params)
    assert out.shape == (B, 1)
    # Kernel uses bf16 weights with f32 accumulation; compare loosely vs f32 reference.
    assert jnp.allclose(out, ref, atol=1e-2, rtol=1e-2), "mismatch vs JAX reference"

    print("KERNEL_OK")
</pallas_src>

<mosaic_0001>
module attributes {stable_mosaic.version = 11 : i64} {
  func.func @classifier_head_kernel(%arg0: i32, %arg1: i32, %arg2: memref<2x32xf32, #tpu.memory_space<vmem>>, %arg3: memref<2x32xf32, #tpu.memory_space<vmem>>, %arg4: memref<2x32xf32, #tpu.memory_space<vmem>>, %arg5: memref<2x32xf32, #tpu.memory_space<vmem>>, %arg6: memref<2x8x32xf32, #tpu.memory_space<vmem>>, %arg7: memref<160x32xbf16, #tpu.memory_space<vmem>>, %arg8: memref<1x32xf32, #tpu.memory_space<vmem>>, %arg9: memref<32x32xbf16, #tpu.memory_space<vmem>>, %arg10: memref<1x32xf32, #tpu.memory_space<vmem>>, %arg11: memref<1x32xf32, #tpu.memory_space<vmem>>, %arg12: memref<1x1xf32, #tpu.memory_space<vmem>>, %arg13: memref<2x1xf32, #tpu.memory_space<vmem>>, %arg14: memref<2x32xf32, #tpu.memory_space<vmem>>) attributes {dimension_semantics = [#tpu.dimension_semantics<parallel>, #tpu.dimension_semantics<arbitrary>], iteration_bounds = array<i64: 1, 1>, scalar_prefetch = 0 : i64, scratch_operands = 1 : i64, tpu.core_type = #tpu.core_type<tc>, window_params = [{transform_indices = @transform_0, window_bounds = array<i64: 2, 32>}, {transform_indices = @transform_1, window_bounds = array<i64: 2, 32>}, {transform_indices = @transform_2, window_bounds = array<i64: 2, 32>}, {transform_indices = @transform_3, window_bounds = array<i64: 2, 32>}, {transform_indices = @transform_4, window_bounds = array<i64: 2, 8, 32>}, {pipeline_mode = #tpu.pipeline_mode<synchronous>, transform_indices = @transform_5, window_bounds = array<i64: 160, 32>}, {pipeline_mode = #tpu.pipeline_mode<synchronous>, transform_indices = @transform_6, window_bounds = array<i64: 1, 32>}, {pipeline_mode = #tpu.pipeline_mode<synchronous>, transform_indices = @transform_7, window_bounds = array<i64: 32, 32>}, {pipeline_mode = #tpu.pipeline_mode<synchronous>, transform_indices = @transform_8, window_bounds = array<i64: 1, 32>}, {pipeline_mode = #tpu.pipeline_mode<synchronous>, transform_indices = @transform_9, window_bounds = array<i64: 1, 32>}, {pipeline_mode = #tpu.pipeline_mode<synchronous>, transform_indices = @transform_10, window_bounds = array<i64: 1, 1>}, {transform_indices = @transform_11, window_bounds = array<i64: 2, 1>}]} {
    %c0_i32 = arith.constant 0 : i32
    %0 = arith.cmpi eq, %arg1, %c0_i32 : i32
    %1 = arith.extui %0 : i1 to i32
    %c0_i32_0 = arith.constant 0 : i32
    %2 = arith.cmpi ne, %1, %c0_i32_0 : i32
    scf.if %2 {
      %cst_9 = arith.constant 0.000000e+00 : f32
      %11 = vector.broadcast %cst_9 : f32 to vector<2x32xf32>
      %c0_10 = arith.constant 0 : index
      %c0_11 = arith.constant 0 : index
      %12 = vector.load %arg14[%c0_10, %c0_11] : memref<2x32xf32, #tpu.memory_space<vmem>>, vector<2x32xf32>
      tpu.vector_store %arg14[%c0_10, %c0_11], %11 {strides = array<i32>} : memref<2x32xf32, #tpu.memory_space<vmem>>, vector<2x32xf32>,
    } else {
    }
    %c0 = arith.constant 0 : index
    %c0_1 = arith.constant 0 : index
    %c0_2 = arith.constant 0 : index
    %3 = vector.load %arg6[%c0, %c0_1, %c0_2] : memref<2x8x32xf32, #tpu.memory_space<vmem>>, vector<2x8x32xf32>
    %c0_3 = arith.constant 0 : index
    %c0_4 = arith.constant 0 : index
    %4 = vector.load %arg14[%c0_3, %c0_4] : memref<2x32xf32, #tpu.memory_space<vmem>>, vector<2x32xf32>
    %cst = arith.constant dense<0.000000e+00> : vector<2x32xf32>
    %5 = vector.multi_reduction <add>, %3, %cst [1] : vector<2x8x32xf32> to vector<2x32xf32>
    %6 = arith.addf %4, %5 : vector<2x32xf32>
    %c0_5 = arith.constant 0 : index
    %c0_6 = arith.constant 0 : index
    %7 = vector.load %arg14[%c0_5, %c0_6] : memref<2x32xf32, #tpu.memory_space<vmem>>, vector<2x32xf32>
    tpu.vector_store %arg14[%c0_5, %c0_6], %6 {strides = array<i32>} : memref<2x32xf32, #tpu.memory_space<vmem>>, vector<2x32xf32>,
    %c0_i32_7 = arith.constant 0 : i32
    %8 = arith.cmpi eq, %arg1, %c0_i32_7 : i32
    %9 = arith.extui %8 : i1 to i32
    %c0_i32_8 = arith.constant 0 : i32
    %10 = arith.cmpi ne, %9, %c0_i32_8 : i32
    scf.if %10 {
      %c0_9 = arith.constant 0 : index
      %c0_10 = arith.constant 0 : index
      %11 = vector.load %arg14[%c0_9, %c0_10] : memref<2x32xf32, #tpu.memory_space<vmem>>, vector<2x32xf32>
      %cst_11 = arith.constant 1.250000e-01 : f32
      %12 = vector.broadcast %cst_11 : f32 to vector<2x32xf32>
      %13 = arith.mulf %11, %12 : vector<2x32xf32>
      %14 = arith.truncf %13 : vector<2x32xf32> to vector<2x32xbf16>
      %c0_12 = arith.constant 0 : index
      %c0_13 = arith.constant 0 : index
      %15 = vector.load %arg2[%c0_12, %c0_13] : memref<2x32xf32, #tpu.memory_space<vmem>>, vector<2x32xf32>
      %16 = arith.truncf %15 : vector<2x32xf32> to vector<2x32xbf16>
      %c0_14 = arith.constant 0 : index
      %c0_15 = arith.constant 0 : index
      %17 = vector.load %arg3[%c0_14, %c0_15] : memref<2x32xf32, #tpu.memory_space<vmem>>, vector<2x32xf32>
      %18 = arith.truncf %17 : vector<2x32xf32> to vector<2x32xbf16>
      %c0_16 = arith.constant 0 : index
      %c0_17 = arith.constant 0 : index
      %19 = vector.load %arg4[%c0_16, %c0_17] : memref<2x32xf32, #tpu.memory_space<vmem>>, vector<2x32xf32>
      %20 = arith.truncf %19 : vector<2x32xf32> to vector<2x32xbf16>
      %c0_18 = arith.constant 0 : index
      %c0_19 = arith.constant 0 : index
      %21 = vector.load %arg5[%c0_18, %c0_19] : memref<2x32xf32, #tpu.memory_space<vmem>>, vector<2x32xf32>
      %22 = arith.truncf %21 : vector<2x32xf32> to vector<2x32xbf16>
      %c0_20 = arith.constant 0 : index
      %c0_21 = arith.constant 0 : index
      %23 = vector.load %arg8[%c0_20, %c0_21] : memref<1x32xf32, #tpu.memory_space<vmem>>, vector<1x32xf32>
      %c0_22 = arith.constant 0 : index
      %c0_23 = arith.constant 0 : index
      %24 = vector.load %arg7[%c0_22, %c0_23] : memref<160x32xbf16, #tpu.memory_space<vmem>>, vector<32x32xbf16>
      %cst_24 = arith.constant dense<0.000000e+00> : vector<2x32xf32>
      %25 = tpu.matmul %16, %24, %cst_24 {dimension_numbers = #tpu.dot_dimension_numbers<[1], [0], [0], [1], [0, 0, 1, 1], [], []>} : vector<2x32xbf16>, vector<32x32xbf16>, vector<2x32xf32> -> vector<2x32xf32>
      %26 = vector.broadcast %23 : vector<1x32xf32> to vector<2x32xf32>
      %27 = arith.addf %26, %25 : vector<2x32xf32>
      %c32 = arith.constant 32 : index
      %c0_25 = arith.constant 0 : index
      %28 = vector.load %arg7[%c32, %c0_25] : memref<160x32xbf16, #tpu.memory_space<vmem>>, vector<32x32xbf16>
      %cst_26 = arith.constant dense<0.000000e+00> : vector<2x32xf32>
      %29 = tpu.matmul %18, %28, %cst_26 {dimension_numbers = #tpu.dot_dimension_numbers<[1], [0], [0], [1], [0, 0, 1, 1], [], []>} : vector<2x32xbf16>, vector<32x32xbf16>, vector<2x32xf32> -> vector<2x32xf32>
      %30 = arith.addf %27, %29 : vector<2x32xf32>
      %c64 = arith.constant 64 : index
      %c0_27 = arith.constant 0 : index
      %31 = vector.load %arg7[%c64, %c0_27] : memref<160x32xbf16, #tpu.memory_space<vmem>>, vector<32x32xbf16>
      %cst_28 = arith.constant dense<0.000000e+00> : vector<2x32xf32>
      %32 = tpu.matmul %20, %31, %cst_28 {dimension_numbers = #tpu.dot_dimension_numbers<[1], [0], [0], [1], [0, 0, 1, 1], [], []>} : vector<2x32xbf16>, vector<32x32xbf16>, vector<2x32xf32> -> vector<2x32xf32>
      %33 = arith.addf %30, %32 : vector<2x32xf32>
      %c96 = arith.constant 96 : index
      %c0_29 = arith.constant 0 : index
      %34 = vector.load %arg7[%c96, %c0_29] : memref<160x32xbf16, #tpu.memory_space<vmem>>, vector<32x32xbf16>
      %cst_30 = arith.constant dense<0.000000e+00> : vector<2x32xf32>
      %35 = tpu.matmul %22, %34, %cst_30 {dimension_numbers = #tpu.dot_dimension_numbers<[1], [0], [0], [1], [0, 0, 1, 1], [], []>} : vector<2x32xbf16>, vector<32x32xbf16>, vector<2x32xf32> -> vector<2x32xf32>
      %36 = arith.addf %33, %35 : vector<2x32xf32>
      %c128 = arith.constant 128 : index
      %c0_31 = arith.constant 0 : index
      %37 = vector.load %arg7[%c128, %c0_31] : memref<160x32xbf16, #tpu.memory_space<vmem>>, vector<32x32xbf16>
      %cst_32 = arith.constant dense<0.000000e+00> : vector<2x32xf32>
      %38 = tpu.matmul %14, %37, %cst_32 {dimension_numbers = #tpu.dot_dimension_numbers<[1], [0], [0], [1], [0, 0, 1, 1], [], []>} : vector<2x32xbf16>, vector<32x32xbf16>, vector<2x32xf32> -> vector<2x32xf32>
      %39 = arith.addf %36, %38 : vector<2x32xf32>
      %cst_33 = arith.constant 0.000000e+00 : f32
      %40 = vector.broadcast %cst_33 : f32 to vector<2x32xf32>
      %41 = arith.subf %40, %39 : vector<2x32xf32>
      %42 = math.exp %41 : vector<2x32xf32>
      %cst_34 = arith.constant 1.000000e+00 : f32
      %43 = vector.broadcast %cst_34 : f32 to vector<2x32xf32>
      %44 = arith.addf %43, %42 : vector<2x32xf32>
      %cst_35 = arith.constant 1.000000e+00 : f32
      %45 = vector.broadcast %cst_35 : f32 to vector<2x32xf32>
      %46 = arith.divf %45, %44 : vector<2x32xf32>
      %47 = arith.mulf %39, %46 : vector<2x32xf32>
      %48 = arith.truncf %47 : vector<2x32xf32> to vector<2x32xbf16>
      %c0_36 = arith.constant 0 : index
      %c0_37 = arith.constant 0 : index
      %49 = vector.load %arg9[%c0_36, %c0_37] : memref<32x32xbf16, #tpu.memory_space<vmem>>, vector<32x32xbf16>
      %cst_38 = arith.constant dense<0.000000e+00> : vector<2x32xf32>
      %50 = tpu.matmul %48, %49, %cst_38 {dimension_numbers = #tpu.dot_dimension_numbers<[1], [0], [0], [1], [0, 0, 1, 1], [], []>} : vector<2x32xbf16>, vector<32x32xbf16>, vector<2x32xf32> -> vector<2x32xf32>
      %c0_39 = arith.constant 0 : index
      %c0_40 = arith.constant 0 : index
      %51 = vector.load %arg10[%c0_39, %c0_40] : memref<1x32xf32, #tpu.memory_space<vmem>>, vector<1x32xf32>
      %52 = vector.broadcast %51 : vector<1x32xf32> to vector<2x32xf32>
      %53 = arith.addf %50, %52 : vector<2x32xf32>
      %cst_41 = arith.constant 0.000000e+00 : f32
      %54 = vector.broadcast %cst_41 : f32 to vector<2x32xf32>
      %55 = arith.subf %54, %53 : vector<2x32xf32>
      %56 = math.exp %55 : vector<2x32xf32>
      %cst_42 = arith.constant 1.000000e+00 : f32
      %57 = vector.broadcast %cst_42 : f32 to vector<2x32xf32>
      %58 = arith.addf %57, %56 : vector<2x32xf32>
      %cst_43 = arith.constant 1.000000e+00 : f32
      %59 = vector.broadcast %cst_43 : f32 to vector<2x32xf32>
      %60 = arith.divf %59, %58 : vector<2x32xf32>
      %61 = arith.mulf %53, %60 : vector<2x32xf32>
      %c0_44 = arith.constant 0 : index
      %c0_45 = arith.constant 0 : index
      %62 = vector.load %arg11[%c0_44, %c0_45] : memref<1x32xf32, #tpu.memory_space<vmem>>, vector<1x32xf32>
      %63 = vector.broadcast %62 : vector<1x32xf32> to vector<2x32xf32>
      %64 = arith.mulf %61, %63 : vector<2x32xf32>
      %cst_46 = arith.constant dense<0.000000e+00> : vector<2xf32>
      %65 = vector.multi_reduction <add>, %64, %cst_46 [1] : vector<2x32xf32> to vector<2xf32>
      %66 = vector.shape_cast %65 : vector<2xf32> to vector<2x1xf32>
      %c0_47 = arith.constant 0 : index
      %c0_48 = arith.constant 0 : index
      %67 = vector.load %arg12[%c0_47, %c0_48] : memref<1x1xf32, #tpu.memory_space<vmem>>, vector<1x1xf32>
      %68 = vector.broadcast %67 : vector<1x1xf32> to vector<2x1xf32>
      %69 = arith.addf %66, %68 : vector<2x1xf32>
      %c0_49 = arith.constant 0 : index
      %c0_50 = arith.constant 0 : index
      %70 = vector.load %arg13[%c0_49, %c0_50] : memref<2x1xf32, #tpu.memory_space<vmem>>, vector<2x1xf32>
      tpu.vector_store %arg13[%c0_49, %c0_50], %69 {strides = array<i32>} : memref<2x1xf32, #tpu.memory_space<vmem>>, vector<2x1xf32>,
    } else {
    }
    return
  }
  func.func @transform_0(%arg0: i32, %arg1: i32) -> (i32, i32) {
    %c0_i32 = arith.constant 0 : i32
    %c0_i32_0 = arith.constant 0 : i32
    return %arg0, %c0_i32 : i32, i32
  }
  func.func @transform_1(%arg0: i32, %arg1: i32) -> (i32, i32) {
    %c0_i32 = arith.constant 0 : i32
    %c0_i32_0 = arith.constant 0 : i32
    return %arg0, %c0_i32 : i32, i32
  }
  func.func @transform_2(%arg0: i32, %arg1: i32) -> (i32, i32) {
    %c0_i32 = arith.constant 0 : i32
    %c0_i32_0 = arith.constant 0 : i32
    return %arg0, %c0_i32 : i32, i32
  }
  func.func @transform_3(%arg0: i32, %arg1: i32) -> (i32, i32) {
    %c0_i32 = arith.constant 0 : i32
    %c0_i32_0 = arith.constant 0 : i32
    return %arg0, %c0_i32 : i32, i32
  }
  func.func @transform_4(%arg0: i32, %arg1: i32) -> (i32, i32, i32) {
    %c0_i32 = arith.constant 0 : i32
    %c0_i32_0 = arith.constant 0 : i32
    return %arg0, %arg1, %c0_i32 : i32, i32, i32
  }
  func.func @transform_5(%arg0: i32, %arg1: i32) -> (i32, i32) {
    %c0_i32 = arith.constant 0 : i32
    %c0_i32_0 = arith.constant 0 : i32
    %c0_i32_1 = arith.constant 0 : i32
    return %c0_i32, %c0_i32_0 : i32, i32
  }
  func.func @transform_6(%arg0: i32, %arg1: i32) -> (i32, i32) {
    %c0_i32 = arith.constant 0 : i32
    %c0_i32_0 = arith.constant 0 : i32
    %c0_i32_1 = arith.constant 0 : i32
    return %c0_i32, %c0_i32_0 : i32, i32
  }
  func.func @transform_7(%arg0: i32, %arg1: i32) -> (i32, i32) {
    %c0_i32 = arith.constant 0 : i32
    %c0_i32_0 = arith.constant 0 : i32
    %c0_i32_1 = arith.constant 0 : i32
    return %c0_i32, %c0_i32_0 : i32, i32
  }
  func.func @transform_8(%arg0: i32, %arg1: i32) -> (i32, i32) {
    %c0_i32 = arith.constant 0 : i32
    %c0_i32_0 = arith.constant 0 : i32
    %c0_i32_1 = arith.constant 0 : i32
    return %c0_i32, %c0_i32_0 : i32, i32
  }
  func.func @transform_9(%arg0: i32, %arg1: i32) -> (i32, i32) {
    %c0_i32 = arith.constant 0 : i32
    %c0_i32_0 = arith.constant 0 : i32
    %c0_i32_1 = arith.constant 0 : i32
    return %c0_i32, %c0_i32_0 : i32, i32
  }
  func.func @transform_10(%arg0: i32, %arg1: i32) -> (i32, i32) {
    %c0_i32 = arith.constant 0 : i32
    %c0_i32_0 = arith.constant 0 : i32
    %c0_i32_1 = arith.constant 0 : i32
    return %c0_i32, %c0_i32_0 : i32, i32
  }
  func.func @transform_11(%arg0: i32, %arg1: i32) -> (i32, i32) {
    %c0_i32 = arith.constant 0 : i32
    %c0_i32_0 = arith.constant 0 : i32
    return %arg0, %c0_i32 : i32, i32
  }
}

module attributes {stable_mosaic.version = 11 : i64} {
  func.func @classifier_head_kernel(%arg0: i32, %arg1: i32, %arg2: memref<2x32xf32, #tpu.memory_space<vmem>>, %arg3: memref<2x32xf32, #tpu.memory_space<vmem>>, %arg4: memref<2x32xf32, #tpu.memory_space<vmem>>, %arg5: memref<2x32xf32, #tpu.memory_space<vmem>>, %arg6: memref<2x8x32xf32, #tpu.memory_space<vmem>>, %arg7: memref<160x32xbf16, #tpu.memory_space<vmem>>, %arg8: memref<1x32xf32, #tpu.memory_space<vmem>>, %arg9: memref<32x32xbf16, #tpu.memory_space<vmem>>, %arg10: memref<1x32xf32, #tpu.memory_space<vmem>>, %arg11: memref<1x32xf32, #tpu.memory_space<vmem>>, %arg12: memref<1x1xf32, #tpu.memory_space<vmem>>, %arg13: memref<2x1xf32, #tpu.memory_space<vmem>>, %arg14: memref<2x32xf32, #tpu.memory_space<vmem>>) attributes {dimension_semantics = [#tpu.dimension_semantics<parallel>, #tpu.dimension_semantics<arbitrary>], iteration_bounds = array<i64: 1, 1>, scalar_prefetch = 0 : i64, scratch_operands = 1 : i64, tpu.core_type = #tpu.core_type<tc>, window_params = [{transform_indices = @transform_0, window_bounds = array<i64: 2, 32>}, {transform_indices = @transform_1, window_bounds = array<i64: 2, 32>}, {transform_indices = @transform_2, window_bounds = array<i64: 2, 32>}, {transform_indices = @transform_3, window_bounds = array<i64: 2, 32>}, {transform_indices = @transform_4, window_bounds = array<i64: 2, 8, 32>}, {pipeline_mode = #tpu.pipeline_mode<synchronous>, transform_indices = @transform_5, window_bounds = array<i64: 160, 32>}, {pipeline_mode = #tpu.pipeline_mode<synchronous>, transform_indices = @transform_6, window_bounds = array<i64: 1, 32>}, {pipeline_mode = #tpu.pipeline_mode<synchronous>, transform_indices = @transform_7, window_bounds = array<i64: 32, 32>}, {pipeline_mode = #tpu.pipeline_mode<synchronous>, transform_indices = @transform_8, window_bounds = array<i64: 1, 32>}, {pipeline_mode = #tpu.pipeline_mode<synchronous>, transform_indices = @transform_9, window_bounds = array<i64: 1, 32>}, {pipeline_mode = #tpu.pipeline_mode<synchronous>, transform_indices = @transform_10, window_bounds = array<i64: 1, 1>}, {transform_indices = @transform_11, window_bounds = array<i64: 2, 1>}]} {
    %c0_i32 = arith.constant 0 : i32
    %0 = arith.cmpi eq, %arg1, %c0_i32 : i32
    %1 = arith.extui %0 : i1 to i32
    %c0_i32_0 = arith.constant 0 : i32
    %2 = arith.cmpi ne, %1, %c0_i32_0 : i32
    scf.if %2 {
      %cst_9 = arith.constant 0.000000e+00 : f32
      %11 = vector.broadcast %cst_9 : f32 to vector<2x32xf32>
      %c0_10 = arith.constant 0 : index
      %c0_11 = arith.constant 0 : index
      %12 = vector.load %arg14[%c0_10, %c0_11] : memref<2x32xf32, #tpu.memory_space<vmem>>, vector<2x32xf32>
      tpu.vector_store %arg14[%c0_10, %c0_11], %11 {strides = array<i32>} : memref<2x32xf32, #tpu.memory_space<vmem>>, vector<2x32xf32>,
    } else {
    }
    %c0 = arith.constant 0 : index
    %c0_1 = arith.constant 0 : index
    %c0_2 = arith.constant 0 : index
    %3 = vector.load %arg6[%c0, %c0_1, %c0_2] : memref<2x8x32xf32, #tpu.memory_space<vmem>>, vector<2x8x32xf32>
    %c0_3 = arith.constant 0 : index
    %c0_4 = arith.constant 0 : index
    %4 = vector.load %arg14[%c0_3, %c0_4] : memref<2x32xf32, #tpu.memory_space<vmem>>, vector<2x32xf32>
    %cst = arith.constant dense<0.000000e+00> : vector<2x32xf32>
    %5 = vector.multi_reduction <add>, %3, %cst [1] : vector<2x8x32xf32> to vector<2x32xf32>
    %6 = arith.addf %4, %5 : vector<2x32xf32>
    %c0_5 = arith.constant 0 : index
    %c0_6 = arith.constant 0 : index
    %7 = vector.load %arg14[%c0_5, %c0_6] : memref<2x32xf32, #tpu.memory_space<vmem>>, vector<2x32xf32>
    tpu.vector_store %arg14[%c0_5, %c0_6], %6 {strides = array<i32>} : memref<2x32xf32, #tpu.memory_space<vmem>>, vector<2x32xf32>,
    %c0_i32_7 = arith.constant 0 : i32
    %8 = arith.cmpi eq, %arg1, %c0_i32_7 : i32
    %9 = arith.extui %8 : i1 to i32
    %c0_i32_8 = arith.constant 0 : i32
    %10 = arith.cmpi ne, %9, %c0_i32_8 : i32
    scf.if %10 {
      %c0_9 = arith.constant 0 : index
      %c0_10 = arith.constant 0 : index
      %11 = vector.load %arg14[%c0_9, %c0_10] : memref<2x32xf32, #tpu.memory_space<vmem>>, vector<2x32xf32>
      %cst_11 = arith.constant 1.250000e-01 : f32
      %12 = vector.broadcast %cst_11 : f32 to vector<2x32xf32>
      %13 = arith.mulf %11, %12 : vector<2x32xf32>
      %14 = arith.truncf %13 : vector<2x32xf32> to vector<2x32xbf16>
      %c0_12 = arith.constant 0 : index
      %c0_13 = arith.constant 0 : index
      %15 = vector.load %arg2[%c0_12, %c0_13] : memref<2x32xf32, #tpu.memory_space<vmem>>, vector<2x32xf32>
      %16 = arith.truncf %15 : vector<2x32xf32> to vector<2x32xbf16>
      %c0_14 = arith.constant 0 : index
      %c0_15 = arith.constant 0 : index
      %17 = vector.load %arg3[%c0_14, %c0_15] : memref<2x32xf32, #tpu.memory_space<vmem>>, vector<2x32xf32>
      %18 = arith.truncf %17 : vector<2x32xf32> to vector<2x32xbf16>
      %c0_16 = arith.constant 0 : index
      %c0_17 = arith.constant 0 : index
      %19 = vector.load %arg4[%c0_16, %c0_17] : memref<2x32xf32, #tpu.memory_space<vmem>>, vector<2x32xf32>
      %20 = arith.truncf %19 : vector<2x32xf32> to vector<2x32xbf16>
      %c0_18 = arith.constant 0 : index
      %c0_19 = arith.constant 0 : index
      %21 = vector.load %arg5[%c0_18, %c0_19] : memref<2x32xf32, #tpu.memory_space<vmem>>, vector<2x32xf32>
      %22 = arith.truncf %21 : vector<2x32xf32> to vector<2x32xbf16>
      %c0_20 = arith.constant 0 : index
      %c0_21 = arith.constant 0 : index
      %23 = vector.load %arg8[%c0_20, %c0_21] : memref<1x32xf32, #tpu.memory_space<vmem>>, vector<1x32xf32>
      %c0_22 = arith.constant 0 : index
      %c0_23 = arith.constant 0 : index
      %24 = vector.load %arg7[%c0_22, %c0_23] : memref<160x32xbf16, #tpu.memory_space<vmem>>, vector<32x32xbf16>
      %cst_24 = arith.constant dense<0.000000e+00> : vector<2x32xf32>
      %25 = tpu.matmul %16, %24, %cst_24 {dimension_numbers = #tpu.dot_dimension_numbers<[1], [0], [0], [1], [0, 0, 1, 1], [], []>} : vector<2x32xbf16>, vector<32x32xbf16>, vector<2x32xf32> -> vector<2x32xf32>
      %26 = vector.broadcast %23 : vector<1x32xf32> to vector<2x32xf32>
      %27 = arith.addf %26, %25 : vector<2x32xf32>
      %c32 = arith.constant 32 : index
      %c0_25 = arith.constant 0 : index
      %28 = vector.load %arg7[%c32, %c0_25] : memref<160x32xbf16, #tpu.memory_space<vmem>>, vector<32x32xbf16>
      %cst_26 = arith.constant dense<0.000000e+00> : vector<2x32xf32>
      %29 = tpu.matmul %18, %28, %cst_26 {dimension_numbers = #tpu.dot_dimension_numbers<[1], [0], [0], [1], [0, 0, 1, 1], [], []>} : vector<2x32xbf16>, vector<32x32xbf16>, vector<2x32xf32> -> vector<2x32xf32>
      %30 = arith.addf %27, %29 : vector<2x32xf32>
      %c64 = arith.constant 64 : index
      %c0_27 = arith.constant 0 : index
      %31 = vector.load %arg7[%c64, %c0_27] : memref<160x32xbf16, #tpu.memory_space<vmem>>, vector<32x32xbf16>
      %cst_28 = arith.constant dense<0.000000e+00> : vector<2x32xf32>
      %32 = tpu.matmul %20, %31, %cst_28 {dimension_numbers = #tpu.dot_dimension_numbers<[1], [0], [0], [1], [0, 0, 1, 1], [], []>} : vector<2x32xbf16>, vector<32x32xbf16>, vector<2x32xf32> -> vector<2x32xf32>
      %33 = arith.addf %30, %32 : vector<2x32xf32>
      %c96 = arith.constant 96 : index
      %c0_29 = arith.constant 0 : index
      %34 = vector.load %arg7[%c96, %c0_29] : memref<160x32xbf16, #tpu.memory_space<vmem>>, vector<32x32xbf16>
      %cst_30 = arith.constant dense<0.000000e+00> : vector<2x32xf32>
      %35 = tpu.matmul %22, %34, %cst_30 {dimension_numbers = #tpu.dot_dimension_numbers<[1], [0], [0], [1], [0, 0, 1, 1], [], []>} : vector<2x32xbf16>, vector<32x32xbf16>, vector<2x32xf32> -> vector<2x32xf32>
      %36 = arith.addf %33, %35 : vector<2x32xf32>
      %c128 = arith.constant 128 : index
      %c0_31 = arith.constant 0 : index
      %37 = vector.load %arg7[%c128, %c0_31] : memref<160x32xbf16, #tpu.memory_space<vmem>>, vector<32x32xbf16>
      %cst_32 = arith.constant dense<0.000000e+00> : vector<2x32xf32>
      %38 = tpu.matmul %14, %37, %cst_32 {dimension_numbers = #tpu.dot_dimension_numbers<[1], [0], [0], [1], [0, 0, 1, 1], [], []>} : vector<2x32xbf16>, vector<32x32xbf16>, vector<2x32xf32> -> vector<2x32xf32>
      %39 = arith.addf %36, %38 : vector<2x32xf32>
      %cst_33 = arith.constant 0.000000e+00 : f32
      %40 = vector.broadcast %cst_33 : f32 to vector<2x32xf32>
      %41 = arith.subf %40, %39 : vector<2x32xf32>
      %42 = math.exp %41 : vector<2x32xf32>
      %cst_34 = arith.constant 1.000000e+00 : f32
      %43 = vector.broadcast %cst_34 : f32 to vector<2x32xf32>
      %44 = arith.addf %43, %42 : vector<2x32xf32>
      %cst_35 = arith.constant 1.000000e+00 : f32
      %45 = vector.broadcast %cst_35 : f32 to vector<2x32xf32>
      %46 = arith.divf %45, %44 : vector<2x32xf32>
      %47 = arith.mulf %39, %46 : vector<2x32xf32>
      %48 = arith.truncf %47 : vector<2x32xf32> to vector<2x32xbf16>
      %c0_36 = arith.constant 0 : index
      %c0_37 = arith.constant 0 : index
      %49 = vector.load %arg9[%c0_36, %c0_37] : memref<32x32xbf16, #tpu.memory_space<vmem>>, vector<32x32xbf16>
      %cst_38 = arith.constant dense<0.000000e+00> : vector<2x32xf32>
      %50 = tpu.matmul %48, %49, %cst_38 {dimension_numbers = #tpu.dot_dimension_numbers<[1], [0], [0], [1], [0, 0, 1, 1], [], []>} : vector<2x32xbf16>, vector<32x32xbf16>, vector<2x32xf32> -> vector<2x32xf32>
      %c0_39 = arith.constant 0 : index
      %c0_40 = arith.constant 0 : index
      %51 = vector.load %arg10[%c0_39, %c0_40] : memref<1x32xf32, #tpu.memory_space<vmem>>, vector<1x32xf32>
      %52 = vector.broadcast %51 : vector<1x32xf32> to vector<2x32xf32>
      %53 = arith.addf %50, %52 : vector<2x32xf32>
      %cst_41 = arith.constant 0.000000e+00 : f32
      %54 = vector.broadcast %cst_41 : f32 to vector<2x32xf32>
      %55 = arith.subf %54, %53 : vector<2x32xf32>
      %56 = math.exp %55 : vector<2x32xf32>
      %cst_42 = arith.constant 1.000000e+00 : f32
      %57 = vector.broadcast %cst_42 : f32 to vector<2x32xf32>
      %58 = arith.addf %57, %56 : vector<2x32xf32>
      %cst_43 = arith.constant 1.000000e+00 : f32
      %59 = vector.broadcast %cst_43 : f32 to vector<2x32xf32>
      %60 = arith.divf %59, %58 : vector<2x32xf32>
      %61 = arith.mulf %53, %60 : vector<2x32xf32>
      %c0_44 = arith.constant 0 : index
      %c0_45 = arith.constant 0 : index
      %62 = vector.load %arg11[%c0_44, %c0_45] : memref<1x32xf32, #tpu.memory_space<vmem>>, vector<1x32xf32>
      %63 = vector.broadcast %62 : vector<1x32xf32> to vector<2x32xf32>
      %64 = arith.mulf %61, %63 : vector<2x32xf32>
      %cst_46 = arith.constant dense<0.000000e+00> : vector<2xf32>
      %65 = vector.multi_reduction <add>, %64, %cst_46 [1] : vector<2x32xf32> to vector<2xf32>
      %66 = vector.shape_cast %65 : vector<2xf32> to vector<2x1xf32>
      %c0_47 = arith.constant 0 : index
      %c0_48 = arith.constant 0 : index
      %67 = vector.load %arg12[%c0_47, %c0_48] : memref<1x1xf32, #tpu.memory_space<vmem>>, vector<1x1xf32>
      %68 = vector.broadcast %67 : vector<1x1xf32> to vector<2x1xf32>
      %69 = arith.addf %66, %68 : vector<2x1xf32>
      %c0_49 = arith.constant 0 : index
      %c0_50 = arith.constant 0 : index
      %70 = vector.load %arg13[%c0_49, %c0_50] : memref<2x1xf32, #tpu.memory_space<vmem>>, vector<2x1xf32>
      tpu.vector_store %arg13[%c0_49, %c0_50], %69 {strides = array<i32>} : memref<2x1xf32, #tpu.memory_space<vmem>>, vector<2x1xf32>,
    } else {
    }
    return
  }
  func.func @transform_0(%arg0: i32, %arg1: i32) -> (i32, i32) {
    %c0_i32 = arith.constant 0 : i32
    %c0_i32_0 = arith.constant 0 : i32
    return %arg0, %c0_i32 : i32, i32
  }
  func.func @transform_1(%arg0: i32, %arg1: i32) -> (i32, i32) {
    %c0_i32 = arith.constant 0 : i32
    %c0_i32_0 = arith.constant 0 : i32
    return %arg0, %c0_i32 : i32, i32
  }
  func.func @transform_2(%arg0: i32, %arg1: i32) -> (i32, i32) {
    %c0_i32 = arith.constant 0 : i32
    %c0_i32_0 = arith.constant 0 : i32
    return %arg0, %c0_i32 : i32, i32
  }
  func.func @transform_3(%arg0: i32, %arg1: i32) -> (i32, i32) {
    %c0_i32 = arith.constant 0 : i32
    %c0_i32_0 = arith.constant 0 : i32
    return %arg0, %c0_i32 : i32, i32
  }
  func.func @transform_4(%arg0: i32, %arg1: i32) -> (i32, i32, i32) {
    %c0_i32 = arith.constant 0 : i32
    %c0_i32_0 = arith.constant 0 : i32
    return %arg0, %arg1, %c0_i32 : i32, i32, i32
  }
  func.func @transform_5(%arg0: i32, %arg1: i32) -> (i32, i32) {
    %c0_i32 = arith.constant 0 : i32
    %c0_i32_0 = arith.constant 0 : i32
    %c0_i32_1 = arith.constant 0 : i32
    return %c0_i32, %c0_i32_0 : i32, i32
  }
  func.func @transform_6(%arg0: i32, %arg1: i32) -> (i32, i32) {
    %c0_i32 = arith.constant 0 : i32
    %c0_i32_0 = arith.constant 0 : i32
    %c0_i32_1 = arith.constant 0 : i32
    return %c0_i32, %c0_i32_0 : i32, i32
  }
  func.func @transform_7(%arg0: i32, %arg1: i32) -> (i32, i32) {
    %c0_i32 = arith.constant 0 : i32
    %c0_i32_0 = arith.constant 0 : i32
    %c0_i32_1 = arith.constant 0 : i32
    return %c0_i32, %c0_i32_0 : i32, i32
  }
  func.func @transform_8(%arg0: i32, %arg1: i32) -> (i32, i32) {
    %c0_i32 = arith.constant 0 : i32
    %c0_i32_0 = arith.constant 0 : i32
    %c0_i32_1 = arith.constant 0 : i32
    return %c0_i32, %c0_i32_0 : i32, i32
  }
  func.func @transform_9(%arg0: i32, %arg1: i32) -> (i32, i32) {
    %c0_i32 = arith.constant 0 : i32
    %c0_i32_0 = arith.constant 0 : i32
    %c0_i32_1 = arith.constant 0 : i32
    return %c0_i32, %c0_i32_0 : i32, i32
  }
  func.func @transform_10(%arg0: i32, %arg1: i32) -> (i32, i32) {
    %c0_i32 = arith.constant 0 : i32
    %c0_i32_0 = arith.constant 0 : i32
    %c0_i32_1 = arith.constant 0 : i32
    return %c0_i32, %c0_i32_0 : i32, i32
  }
  func.func @transform_11(%arg0: i32, %arg1: i32) -> (i32, i32) {
    %c0_i32 = arith.constant 0 : i32
    %c0_i32_0 = arith.constant 0 : i32
    return %arg0, %c0_i32 : i32, i32
  }
}

</mosaic_0001>

<llo_original>
// kernel: tpu_custom_call.1
$region0: #{tpu_custom_call.1}
  #allocation0 [shape = 'u32[]', space=smem, size = 0x4, offset = 0x4, fixed_abs, tag = 'smem constant byte address 0x4 - core index']
  #allocation1 [shape = 'u32[144,128]{1,0:T(1,128)}', space=vmem, size = 0x12000, scoped, tag = 'internal scratch']
  #allocation2 [shape = 'f32[2,32]{1,0:T(2,128)}', space=vmem, size = 0x400, scoped, tag = 'scratch operand']
  #allocation3 [shape = 'f32[1,1]{1,0:T(1,128)S(1)}', space=vmem, size = 0x200, scoped, tag = 'scoped memory for tpu_custom_call.1']
  %s0 = inlined_call_operand.vmem [shape: f32[2,32], index: 0, kind: input, shape index: {}]
  %s1 = inlined_call_operand.vmem [shape: f32[2,32], index: 1, kind: input, shape index: {}]
  %s2 = inlined_call_operand.vmem [shape: f32[2,32], index: 2, kind: input, shape index: {}]
  %s3 = inlined_call_operand.vmem [shape: f32[2,32], index: 3, kind: input, shape index: {}]
  %s4 = inlined_call_operand.vmem [shape: f32[2,8,32], index: 4, kind: input, shape index: {}]
  %s5 = inlined_call_operand.vmem [shape: bf16[160,32], index: 5, kind: input, shape index: {}]
  %s6 = inlined_call_operand.vmem [shape: f32[1,32], index: 6, kind: input, shape index: {}]
  %s7 = inlined_call_operand.vmem [shape: bf16[32,32], index: 7, kind: input, shape index: {}]
  %s8 = inlined_call_operand.vmem [shape: f32[1,32], index: 8, kind: input, shape index: {}]
  %s9 = inlined_call_operand.vmem [shape: f32[1,32], index: 9, kind: input, shape index: {}]
  %s10 = inlined_call_operand.<no memory space> [shape: f32[1,1], index: 10, kind: input, shape index: {}]
  %s11 = inlined_call_operand.vmem [shape: f32[2,1], index: 11, kind: output, shape index: {}]
  %s12 = sld [smem:[#allocation0]]
  $region62: #{tpu_custom_call.1} parent=0
    _
  %s14 = ssub.s32 1, %s12
  %s15 = scalar_select 0, %s14, %s12
  %v16 = vstv %s10
  %17 = vst [vmem:[#allocation3] sm:$0x1] %v16
  // Predicated region
  $region2: #{tpu_custom_call.1} parent=0 // pred_check
    _
  $region3: #{tpu_custom_call.1} parent=0 // pred_check_branch
    %19 = sbr.rel (0) target = $region5
  $region4: #{tpu_custom_call.1} parent=0 // pred_region
    _
  $region5: #{tpu_custom_call.1} parent=0 // pred_fallthru
    _
  // Predicated region
  $region6: #{tpu_custom_call.1} parent=0 // pred_check
    _
  $region7: #{tpu_custom_call.1} parent=0 // pred_check_branch
    %21 = sbr.rel (0) target = $region9
  $region8: #{tpu_custom_call.1} parent=0 // pred_region
    _
  $region9: #{tpu_custom_call.1} parent=0 // pred_fallthru
    _
  // Predicated region
  $region10: #{tpu_custom_call.1} parent=0 // pred_check
    _
  $region11: #{tpu_custom_call.1} parent=0 // pred_check_branch
    %23 = sbr.rel (0) target = $region13
  $region12: #{tpu_custom_call.1} parent=0 // pred_region
    _
  $region13: #{tpu_custom_call.1} parent=0 // pred_fallthru
    _
  // Predicated region
  $region14: #{tpu_custom_call.1} parent=0 // pred_check
    _
  $region15: #{tpu_custom_call.1} parent=0 // pred_check_branch
    %25 = sbr.rel (0) target = $region17
  $region16: #{tpu_custom_call.1} parent=0 // pred_region
    _
  $region17: #{tpu_custom_call.1} parent=0 // pred_fallthru
    _
  // Predicated region
  $region18: #{tpu_custom_call.1} parent=0 // pred_check
    _
  $region19: #{tpu_custom_call.1} parent=0 // pred_check_branch
    %27 = sbr.rel (0) target = $region21
  $region20: #{tpu_custom_call.1} parent=0 // pred_region
    _
  $region21: #{tpu_custom_call.1} parent=0 // pred_fallthru
    _
  // Predicated region
  $region22: #{tpu_custom_call.1} parent=0 // pred_check
    _
  $region23: #{tpu_custom_call.1} parent=0 // pred_check_branch
    %29 = sbr.rel (0) target = $region25
  $region24: #{tpu_custom_call.1} parent=0 // pred_region
    _
  $region25: #{tpu_custom_call.1} parent=0 // pred_fallthru
    _
  // Predicated region
  $region26: #{tpu_custom_call.1} parent=0 // pred_check
    _
  $region27: #{tpu_custom_call.1} parent=0 // pred_check_branch
    %31 = sbr.rel (0) target = $region29
  $region28: #{tpu_custom_call.1} parent=0 // pred_region
    _
  $region29: #{tpu_custom_call.1} parent=0 // pred_fallthru
    _
  // Predicated region
  $region30: #{tpu_custom_call.1} parent=0 // pred_check
    _
  $region31: #{tpu_custom_call.1} parent=0 // pred_check_branch
    %33 = sbr.rel (0) target = $region33
  $region32: #{tpu_custom_call.1} parent=0 // pred_region
    _
  $region33: #{tpu_custom_call.1} parent=0 // pred_fallthru
    _
  // Predicated region
  $region34: #{tpu_custom_call.1} parent=0 // pred_check
    _
  $region35: #{tpu_custom_call.1} parent=0 // pred_check_branch
    %35 = sbr.rel (0) target = $region37
  $region36: #{tpu_custom_call.1} parent=0 // pred_region
    _
  $region37: #{tpu_custom_call.1} parent=0 // pred_fallthru
    _
  // Predicated region
  $region38: #{tpu_custom_call.1} parent=0 // pred_check
    _
  $region39: #{tpu_custom_call.1} parent=0 // pred_check_branch
    %37 = sbr.rel (0) target = $region41
  $region40: #{tpu_custom_call.1} parent=0 // pred_region
    _
  $region41: #{tpu_custom_call.1} parent=0 // pred_fallthru
    _
  // Predicated region
  $region42: #{tpu_custom_call.1} parent=0 // pred_check
    _
  $region43: #{tpu_custom_call.1} parent=0 // pred_check_branch
    %39 = sbr.rel (0) target = $region45
  $region44: #{tpu_custom_call.1} parent=0 // pred_region
    _
  $region45: #{tpu_custom_call.1} parent=0 // pred_fallthru
    _
  %p41 = scmp.eq.s32.totalorder 0, 0
  // Predicated region
  $region46: #{tpu_custom_call.1} parent=0 // pred_check
    %p42 = pneg %p41
  $region47: #{tpu_custom_call.1} parent=0 // pred_check_branch
    %44 = sbr.rel (%p42) target = $region49
  $region48: #{tpu_custom_call.1} parent=0 // pred_region
    %vm45 = vcmask 254976
    %46 = vst.msk [vmem:[#allocation2] sm:$0x3] %vm45, 0.0
  $region49: #{tpu_custom_call.1} parent=0 // pred_fallthru
    _
  %v47 = vld [vmem:[%s4] sm:$0xff]
  %v48 = vld [vmem:[%s4 + $0x8] sm:$0xff]
  %v49 = vld [vmem:[#allocation2] sm:$0x3]
  %vm50 = vcmask 261120
  %v51 = vsel %vm50, %v47, 0.0
  %v52 = vrot.slane %v51, 4
  %v53 = vadd.f32 %v51, %v52
  %v54 = vrot.slane %v53, 2
  %v55 = vadd.f32 %v53, %v54
  %v56 = vrot.slane %v55, 1
  %v57 = vadd.f32 %v55, %v56
  %v58 = vsel %vm50, %v48, 0.0
  %v59 = vrot.slane %v58, 4
  %v60 = vadd.f32 %v58, %v59
  %v61 = vrot.slane %v60, 2
  %v62 = vadd.f32 %v60, %v61
  %v63 = vrot.slane %v62, 1
  %v64 = vadd.f32 %v62, %v63
  %vm67 = vcmask 1041409
  %v68 = vsel %vm67, %v64, %v57
  %v70 = vadd.f32 %v49, %v68
  %vm71 = vcmask 254976
  %72 = vst.msk [vmem:[#allocation2] sm:$0x3] %vm71, %v70
  // Predicated region
  $region50: #{tpu_custom_call.1} parent=0 // pred_check
    %p73 = pneg %p41
  $region51: #{tpu_custom_call.1} parent=0 // pred_check_branch
    %75 = sbr.rel (%p73) target = $region53
  $region52: #{tpu_custom_call.1} parent=0 // pred_region
    %v76 = vld [vmem:[#allocation2] sm:$0x3]
    %v77 = vmul.f32 %v76, 0.125
    %v78 = vpack.c.bf16 %v77, %v77
    %v79 = vld [vmem:[%s0] sm:$0x3]
    %v80 = vpack.c.bf16 %v79, %v79
    %v81 = vld [vmem:[%s1] sm:$0x3]
    %v82 = vpack.c.bf16 %v81, %v81
    %v83 = vld [vmem:[%s2] sm:$0x3]
    %v84 = vpack.c.bf16 %v83, %v83
    %v85 = vld [vmem:[%s3] sm:$0x3]
    %v86 = vpack.c.bf16 %v85, %v85
    %v87 = vld [vmem:[%s6] sm:$0x1]
    %v88 = vld [vmem:[%s5] sm:$0xf]
    %v89 = vld [vmem:[%s5 + $0x4] sm:$0xf]
    %v90 = vld [vmem:[%s5 + $0x8] sm:$0xf]
    %v91 = vld [vmem:[%s5 + $0xc] sm:$0xf]
    %v96 = vunpack.c.l.b16 %v88
    %v97 = vunpack.c.l.b16 %v89
    %v98 = vunpack.c.l.b16 %v90
    %v99 = vunpack.c.l.b16 %v91
    %v100 = vpack.c.b16 %v97, %v96
    %v101 = vpack.c.b16 %v99, %v98
    %v105 = vsel %vm50, %v80, 0
    %107 = vmatprep.subr.bf16.mxu0 0
    %108 = vmatpush1.bf16.msra.mxu0 %v100
    %109 = vmatprep.subr.bf16.mxu0 0
    %110 = vmatpush1.bf16.msra.mxu0 %v101
    %111 = vmatprep.subr.bf16.mxu0 0
    %112 = vmatpush1.bf16.msra.mxu0 0
    %113 = vmatprep.subr.bf16.mxu0 0
    %114 = vmatpush1.bf16.msra.mxu0 0
    %115 = vmatprep.subr.bf16.mxu0 0
    %116 = vmatpush1.bf16.msra.mxu0 0
    %117 = vmatprep.subr.bf16.mxu0 0
    %118 = vmatpush1.bf16.msra.mxu0 0
    %119 = vmatprep.subr.bf16.mxu0 0
    %120 = vmatpush1.bf16.msra.mxu0 0
    %121 = vmatprep.subr.bf16.mxu0 0
    %122 = vmatpush1.bf16.msra.mxu0 0
    %123 = vmatprep.subr.bf16.mxu0 0
    %124 = vmatpush1.bf16.msra.mxu0 0
    %125 = vmatprep.subr.bf16.mxu0 0
    %126 = vmatpush1.bf16.msra.mxu0 0
    %127 = vmatprep.subr.bf16.mxu0 0
    %128 = vmatpush1.bf16.msra.mxu0 0
    %129 = vmatprep.subr.bf16.mxu0 0
    %130 = vmatpush1.bf16.msra.mxu0 0
    %131 = vmatprep.subr.bf16.mxu0 0
    %132 = vmatpush1.bf16.msra.mxu0 0
    %133 = vmatprep.subr.bf16.mxu0 0
    %134 = vmatpush1.bf16.msra.mxu0 0
    %135 = vmatprep.subr.bf16.mxu0 0
    %136 = vmatpush1.bf16.msra.mxu0 0
    %137 = vmatprep.subr.bf16.mxu0 0
    %138 = vmatpush1.bf16.msra.mxu0 0
    %139 = vmatprep.mubr.bf16.mxu0 0
    %140 = vmatmul.mubr.bf16.gmra.mrb[0].mxu0 %v105
    %v141 = vpop.f32.mrb[0].mxu0
    %v142 = vadd.f32 0.0, %v141
    %v143 = vpop.f32.mrb[0].mxu0
    %v144 = vpop.f32.mrb[0].mxu0
    %v145 = vpop.f32.mrb[0].mxu0
    %146 = vdwg.mxu0
    %v148 = vlaneseq
    %v149 = vshrl.u32 %v148, 7
    %v150 = vsub.s32 0, %v149
    %v151 = vrot.slane %v87, %v150
    %v153 = vadd.f32 %v151, %v142
    %v154 = vld [vmem:[%s5 + $0x10] sm:$0xf]
    %v155 = vld [vmem:[%s5 + $0x14] sm:$0xf]
    %v156 = vld [vmem:[%s5 + $0x18] sm:$0xf]
    %v157 = vld [vmem:[%s5 + $0x1c] sm:$0xf]
    %v162 = vunpack.c.l.b16 %v154
    %v163 = vunpack.c.l.b16 %v155
    %v164 = vunpack.c.l.b16 %v156
    %v165 = vunpack.c.l.b16 %v157
    %v166 = vpack.c.b16 %v163, %v162
    %v167 = vpack.c.b16 %v165, %v164
    %v171 = vsel %vm50, %v82, 0
    %173 = vmatprep.subr.bf16.mxu0 0
    %174 = vmatpush1.bf16.msra.mxu0 %v166
    %175 = vmatprep.subr.bf16.mxu0 0
    %176 = vmatpush1.bf16.msra.mxu0 %v167
    %177 = vmatprep.subr.bf16.mxu0 0
    %178 = vmatpush1.bf16.msra.mxu0 0
    %179 = vmatprep.subr.bf16.mxu0 0
    %180 = vmatpush1.bf16.msra.mxu0 0
    %181 = vmatprep.subr.bf16.mxu0 0
    %182 = vmatpush1.bf16.msra.mxu0 0
    %183 = vmatprep.subr.bf16.mxu0 0
    %184 = vmatpush1.bf16.msra.mxu0 0
    %185 = vmatprep.subr.bf16.mxu0 0
    %186 = vmatpush1.bf16.msra.mxu0 0
    %187 = vmatprep.subr.bf16.mxu0 0
    %188 = vmatpush1.bf16.msra.mxu0 0
    %189 = vmatprep.subr.bf16.mxu0 0
    %190 = vmatpush1.bf16.msra.mxu0 0
    %191 = vmatprep.subr.bf16.mxu0 0
    %192 = vmatpush1.bf16.msra.mxu0 0
    %193 = vmatprep.subr.bf16.mxu0 0
    %194 = vmatpush1.bf16.msra.mxu0 0
    %195 = vmatprep.subr.bf16.mxu0 0
    %196 = vmatpush1.bf16.msra.mxu0 0
    %197 = vmatprep.subr.bf16.mxu0 0
    %198 = vmatpush1.bf16.msra.mxu0 0
    %199 = vmatprep.subr.bf16.mxu0 0
    %200 = vmatpush1.bf16.msra.mxu0 0
    %201 = vmatprep.subr.bf16.mxu0 0
    %202 = vmatpush1.bf16.msra.mxu0 0
    %203 = vmatprep.subr.bf16.mxu0 0
    %204 = vmatpush1.bf16.msra.mxu0 0
    %205 = vmatprep.mubr.bf16.mxu0 0
    %206 = vmatmul.mubr.bf16.gmra.mrb[0].mxu0 %v171
    %v207 = vpop.f32.mrb[0].mxu0
    %v208 = vadd.f32 0.0, %v207
    %v209 = vpop.f32.mrb[0].mxu0
    %v210 = vpop.f32.mrb[0].mxu0
    %v211 = vpop.f32.mrb[0].mxu0
    %212 = vdwg.mxu0
    %v213 = vadd.f32 %v153, %v208
    %v214 = vld [vmem:[%s5 + $0x20] sm:$0xf]
    %v215 = vld [vmem:[%s5 + $0x24] sm:$0xf]
    %v216 = vld [vmem:[%s5 + $0x28] sm:$0xf]
    %v217 = vld [vmem:[%s5 + $0x2c] sm:$0xf]
    %v222 = vunpack.c.l.b16 %v214
    %v223 = vunpack.c.l.b16 %v215
    %v224 = vunpack.c.l.b16 %v216
    %v225 = vunpack.c.l.b16 %v217
    %v226 = vpack.c.b16 %v223, %v222
    %v227 = vpack.c.b16 %v225, %v224
    %v231 = vsel %vm50, %v84, 0
    %233 = vmatprep.subr.bf16.mxu0 0
    %234 = vmatpush1.bf16.msra.mxu0 %v226
    %235 = vmatprep.subr.bf16.mxu0 0
    %236 = vmatpush1.bf16.msra.mxu0 %v227
    %237 = vmatprep.subr.bf16.mxu0 0
    %238 = vmatpush1.bf16.msra.mxu0 0
    %239 = vmatprep.subr.bf16.mxu0 0
    %240 = vmatpush1.bf16.msra.mxu0 0
    %241 = vmatprep.subr.bf16.mxu0 0
    %242 = vmatpush1.bf16.msra.mxu0 0
    %243 = vmatprep.subr.bf16.mxu0 0
    %244 = vmatpush1.bf16.msra.mxu0 0
    %245 = vmatprep.subr.bf16.mxu0 0
    %246 = vmatpush1.bf16.msra.mxu0 0
    %247 = vmatprep.subr.bf16.mxu0 0
    %248 = vmatpush1.bf16.msra.mxu0 0
    %249 = vmatprep.subr.bf16.mxu0 0
    %250 = vmatpush1.bf16.msra.mxu0 0
    %251 = vmatprep.subr.bf16.mxu0 0
    %252 = vmatpush1.bf16.msra.mxu0 0
    %253 = vmatprep.subr.bf16.mxu0 0
    %254 = vmatpush1.bf16.msra.mxu0 0
    %255 = vmatprep.subr.bf16.mxu0 0
    %256 = vmatpush1.bf16.msra.mxu0 0
    %257 = vmatprep.subr.bf16.mxu0 0
    %258 = vmatpush1.bf16.msra.mxu0 0
    %259 = vmatprep.subr.bf16.mxu0 0
    %260 = vmatpush1.bf16.msra.mxu0 0
    %261 = vmatprep.subr.bf16.mxu0 0
    %262 = vmatpush1.bf16.msra.mxu0 0
    %263 = vmatprep.subr.bf16.mxu0 0
    %264 = vmatpush1.bf16.msra.mxu0 0
    %265 = vmatprep.mubr.bf16.mxu0 0
    %266 = vmatmul.mubr.bf16.gmra.mrb[0].mxu0 %v231
    %v267 = vpop.f32.mrb[0].mxu0
    %v268 = vadd.f32 0.0, %v267
    %v269 = vpop.f32.mrb[0].mxu0
    %v270 = vpop.f32.mrb[0].mxu0
    %v271 = vpop.f32.mrb[0].mxu0
    %272 = vdwg.mxu0
    %v273 = vadd.f32 %v213, %v268
    %v274 = vld [vmem:[%s5 + $0x30] sm:$0xf]
    %v275 = vld [vmem:[%s5 + $0x34] sm:$0xf]
    %v276 = vld [vmem:[%s5 + $0x38] sm:$0xf]
    %v277 = vld [vmem:[%s5 + $0x3c] sm:$0xf]
    %v282 = vunpack.c.l.b16 %v274
    %v283 = vunpack.c.l.b16 %v275
    %v284 = vunpack.c.l.b16 %v276
    %v285 = vunpack.c.l.b16 %v277
    %v286 = vpack.c.b16 %v283, %v282
    %v287 = vpack.c.b16 %v285, %v284
    %v291 = vsel %vm50, %v86, 0
    %293 = vmatprep.subr.bf16.mxu0 0
    %294 = vmatpush1.bf16.msra.mxu0 %v286
    %295 = vmatprep.subr.bf16.mxu0 0
    %296 = vmatpush1.bf16.msra.mxu0 %v287
    %297 = vmatprep.subr.bf16.mxu0 0
    %298 = vmatpush1.bf16.msra.mxu0 0
    %299 = vmatprep.subr.bf16.mxu0 0
    %300 = vmatpush1.bf16.msra.mxu0 0
    %301 = vmatprep.subr.bf16.mxu0 0
    %302 = vmatpush1.bf16.msra.mxu0 0
    %303 = vmatprep.subr.bf16.mxu0 0
    %304 = vmatpush1.bf16.msra.mxu0 0
    %305 = vmatprep.subr.bf16.mxu0 0
    %306 = vmatpush1.bf16.msra.mxu0 0
    %307 = vmatprep.subr.bf16.mxu0 0
    %308 = vmatpush1.bf16.msra.mxu0 0
    %309 = vmatprep.subr.bf16.mxu0 0
    %310 = vmatpush1.bf16.msra.mxu0 0
    %311 = vmatprep.subr.bf16.mxu0 0
    %312 = vmatpush1.bf16.msra.mxu0 0
    %313 = vmatprep.subr.bf16.mxu0 0
    %314 = vmatpush1.bf16.msra.mxu0 0
    %315 = vmatprep.subr.bf16.mxu0 0
    %316 = vmatpush1.bf16.msra.mxu0 0
    %317 = vmatprep.subr.bf16.mxu0 0
    %318 = vmatpush1.bf16.msra.mxu0 0
    %319 = vmatprep.subr.bf16.mxu0 0
    %320 = vmatpush1.bf16.msra.mxu0 0
    %321 = vmatprep.subr.bf16.mxu0 0
    %322 = vmatpush1.bf16.msra.mxu0 0
    %323 = vmatprep.subr.bf16.mxu0 0
    %324 = vmatpush1.bf16.msra.mxu0 0
    %325 = vmatprep.mubr.bf16.mxu0 0
    %326 = vmatmul.mubr.bf16.gmra.mrb[0].mxu0 %v291
    %v327 = vpop.f32.mrb[0].mxu0
    %v328 = vadd.f32 0.0, %v327
    %v329 = vpop.f32.mrb[0].mxu0
    %v330 = vpop.f32.mrb[0].mxu0
    %v331 = vpop.f32.mrb[0].mxu0
    %332 = vdwg.mxu0
    %v333 = vadd.f32 %v273, %v328
    %v334 = vld [vmem:[%s5 + $0x40] sm:$0xf]
    %v335 = vld [vmem:[%s5 + $0x44] sm:$0xf]
    %v336 = vld [vmem:[%s5 + $0x48] sm:$0xf]
    %v337 = vld [vmem:[%s5 + $0x4c] sm:$0xf]
    %v342 = vunpack.c.l.b16 %v334
    %v343 = vunpack.c.l.b16 %v335
    %v344 = vunpack.c.l.b16 %v336
    %v345 = vunpack.c.l.b16 %v337
    %v346 = vpack.c.b16 %v343, %v342
    %v347 = vpack.c.b16 %v345, %v344
    %v351 = vsel %vm50, %v78, 0
    %353 = vmatprep.subr.bf16.mxu0 0
    %354 = vmatpush1.bf16.msra.mxu0 %v346
    %355 = vmatprep.subr.bf16.mxu0 0
    %356 = vmatpush1.bf16.msra.mxu0 %v347
    %357 = vmatprep.subr.bf16.mxu0 0
    %358 = vmatpush1.bf16.msra.mxu0 0
    %359 = vmatprep.subr.bf16.mxu0 0
    %360 = vmatpush1.bf16.msra.mxu0 0
    %361 = vmatprep.subr.bf16.mxu0 0
    %362 = vmatpush1.bf16.msra.mxu0 0
    %363 = vmatprep.subr.bf16.mxu0 0
    %364 = vmatpush1.bf16.msra.mxu0 0
    %365 = vmatprep.subr.bf16.mxu0 0
    %366 = vmatpush1.bf16.msra.mxu0 0
    %367 = vmatprep.subr.bf16.mxu0 0
    %368 = vmatpush1.bf16.msra.mxu0 0
    %369 = vmatprep.subr.bf16.mxu0 0
    %370 = vmatpush1.bf16.msra.mxu0 0
    %371 = vmatprep.subr.bf16.mxu0 0
    %372 = vmatpush1.bf16.msra.mxu0 0
    %373 = vmatprep.subr.bf16.mxu0 0
    %374 = vmatpush1.bf16.msra.mxu0 0
    %375 = vmatprep.subr.bf16.mxu0 0
    %376 = vmatpush1.bf16.msra.mxu0 0
    %377 = vmatprep.subr.bf16.mxu0 0
    %378 = vmatpush1.bf16.msra.mxu0 0
    %379 = vmatprep.subr.bf16.mxu0 0
    %380 = vmatpush1.bf16.msra.mxu0 0
    %381 = vmatprep.subr.bf16.mxu0 0
    %382 = vmatpush1.bf16.msra.mxu0 0
    %383 = vmatprep.subr.bf16.mxu0 0
    %384 = vmatpush1.bf16.msra.mxu0 0
    %385 = vmatprep.mubr.bf16.mxu0 0
    %386 = vmatmul.mubr.bf16.gmra.mrb[0].mxu0 %v351
    %v387 = vpop.f32.mrb[0].mxu0
    %v388 = vadd.f32 0.0, %v387
    %v389 = vpop.f32.mrb[0].mxu0
    %v390 = vpop.f32.mrb[0].mxu0
    %v391 = vpop.f32.mrb[0].mxu0
    %392 = vdwg.mxu0
    %v393 = vadd.f32 %v333, %v388
    %v394 = vsub.f32 0.0, %v393
    %v395 = vmul.f32 %v394, 1.442695
    %v396 = vpow.pop %v395
    %v397 = vadd.f32 %v396, 1.0
    %v398 = vrcp.pop %v397
    %v399 = vmul.f32 1.0, %v398
    %v400 = vmul.f32 %v393, %v399
    %v401 = vpack.c.bf16 %v400, %v400
    %v402 = vld [vmem:[%s7] sm:$0xf]
    %v403 = vld [vmem:[%s7 + $0x4] sm:$0xf]
    %v404 = vld [vmem:[%s7 + $0x8] sm:$0xf]
    %v405 = vld [vmem:[%s7 + $0xc] sm:$0xf]
    %v406 = vld [vmem:[%s8] sm:$0x1]
    %v408 = vlaneseq
    %v409 = vshrl.u32 %v408, 7
    %v410 = vsub.s32 0, %v409
    %v411 = vrot.slane %v406, %v410
    %v417 = vunpack.c.l.b16 %v402
    %v418 = vunpack.c.l.b16 %v403
    %v419 = vunpack.c.l.b16 %v404
    %v420 = vunpack.c.l.b16 %v405
    %v421 = vpack.c.b16 %v418, %v417
    %v422 = vpack.c.b16 %v420, %v419
    %v426 = vsel %vm50, %v401, 0
    %428 = vmatprep.subr.bf16.mxu0 0
    %429 = vmatpush1.bf16.msra.mxu0 %v421
    %430 = vmatprep.subr.bf16.mxu0 0
    %431 = vmatpush1.bf16.msra.mxu0 %v422
    %432 = vmatprep.subr.bf16.mxu0 0
    %433 = vmatpush1.bf16.msra.mxu0 0
    %434 = vmatprep.subr.bf16.mxu0 0
    %435 = vmatpush1.bf16.msra.mxu0 0
    %436 = vmatprep.subr.bf16.mxu0 0
    %437 = vmatpush1.bf16.msra.mxu0 0
    %438 = vmatprep.subr.bf16.mxu0 0
    %439 = vmatpush1.bf16.msra.mxu0 0
    %440 = vmatprep.subr.bf16.mxu0 0
    %441 = vmatpush1.bf16.msra.mxu0 0
    %442 = vmatprep.subr.bf16.mxu0 0
    %443 = vmatpush1.bf16.msra.mxu0 0
    %444 = vmatprep.subr.bf16.mxu0 0
    %445 = vmatpush1.bf16.msra.mxu0 0
    %446 = vmatprep.subr.bf16.mxu0 0
    %447 = vmatpush1.bf16.msra.mxu0 0
    %448 = vmatprep.subr.bf16.mxu0 0
    %449 = vmatpush1.bf16.msra.mxu0 0
    %450 = vmatprep.subr.bf16.mxu0 0
    %451 = vmatpush1.bf16.msra.mxu0 0
    %452 = vmatprep.subr.bf16.mxu0 0
    %453 = vmatpush1.bf16.msra.mxu0 0
    %454 = vmatprep.subr.bf16.mxu0 0
    %455 = vmatpush1.bf16.msra.mxu0 0
    %456 = vmatprep.subr.bf16.mxu0 0
    %457 = vmatpush1.bf16.msra.mxu0 0
    %458 = vmatprep.subr.bf16.mxu0 0
    %459 = vmatpush1.bf16.msra.mxu0 0
    %460 = vmatprep.mubr.bf16.mxu0 0
    %461 = vmatmul.mubr.bf16.gmra.mrb[0].mxu0 %v426
    %v462 = vpop.f32.mrb[0].mxu0
    %v463 = vadd.f32 %v411, %v462
    %v464 = vpop.f32.mrb[0].mxu0
    %v465 = vpop.f32.mrb[0].mxu0
    %v466 = vpop.f32.mrb[0].mxu0
    %467 = vdwg.mxu0
    %v468 = vsub.f32 0.0, %v463
    %v469 = vmul.f32 %v468, 1.442695
    %v470 = vpow.pop %v469
    %v471 = vadd.f32 %v470, 1.0
    %v472 = vrcp.pop %v471
    %v473 = vmul.f32 1.0, %v472
    %v474 = vmul.f32 %v463, %v473
    %v475 = vld [vmem:[%s9] sm:$0x1]
    %v477 = vlaneseq
    %v478 = vshrl.u32 %v477, 7
    %v479 = vsub.s32 0, %v478
    %v480 = vrot.slane %v475, %v479
    %v482 = vmul.f32 %v474, %v480
    %v483 = vsel %vm71, %v482, 0.0
    %484 = vadd.xlane.f32.xlu0 %v483
    %v485 = vpop.xlane.xlu0 %484
    %v486 = vld [vmem:[#allocation3] sm:$0x1]
    %v488 = vlaneseq
    %v489 = vshrl.u32 %v488, 7
    %v490 = vsub.s32 0, %v489
    %v491 = vrot.slane %v486, %v490
    %v493 = vadd.f32 %v485, %v491
    %vm494 = vcmask 1024
    %495 = vst.msk [vmem:[%s11] sm:$0x3] %vm494, %v493
  $region53: #{tpu_custom_call.1} parent=0 // pred_fallthru
    _
  // Predicated region
  $region54: #{tpu_custom_call.1} parent=0 // pred_check
    _
  $region55: #{tpu_custom_call.1} parent=0 // pred_check_branch
    %497 = sbr.rel (0) target = $region57
  $region56: #{tpu_custom_call.1} parent=0 // pred_region
    _
  $region57: #{tpu_custom_call.1} parent=0 // pred_fallthru
    _
  // Predicated region
  $region58: #{tpu_custom_call.1} parent=0 // pred_check
    _
  $region59: #{tpu_custom_call.1} parent=0 // pred_check_branch
    %499 = sbr.rel (0) target = $region61
  $region60: #{tpu_custom_call.1} parent=0 // pred_region
    _
  $region61: #{tpu_custom_call.1} parent=0 // pred_fallthru
    _

// kernel: tpu_custom_call.1
$region0: #{tpu_custom_call.1}
  #allocation0 [shape = 'u32[]', space=smem, size = 0x4, offset = 0x4, fixed_abs, tag = 'smem constant byte address 0x4 - core index']
  #allocation1 [shape = 'u32[144,128]{1,0:T(1,128)}', space=vmem, size = 0x12000, scoped, tag = 'internal scratch']
  #allocation2 [shape = 'f32[2,32]{1,0:T(2,128)}', space=vmem, size = 0x400, scoped, tag = 'scratch operand']
  #allocation3 [shape = 'f32[1,1]{1,0:T(1,128)S(1)}', space=vmem, size = 0x200, scoped, tag = 'scoped memory for tpu_custom_call.1']
  %s0 = inlined_call_operand.vmem [shape: f32[2,32], index: 0, kind: input, shape index: {}]
  %s1 = inlined_call_operand.vmem [shape: f32[2,32], index: 1, kind: input, shape index: {}]
  %s2 = inlined_call_operand.vmem [shape: f32[2,32], index: 2, kind: input, shape index: {}]
  %s3 = inlined_call_operand.vmem [shape: f32[2,32], index: 3, kind: input, shape index: {}]
  %s4 = inlined_call_operand.vmem [shape: f32[2,8,32], index: 4, kind: input, shape index: {}]
  %s5 = inlined_call_operand.vmem [shape: bf16[160,32], index: 5, kind: input, shape index: {}]
  %s6 = inlined_call_operand.vmem [shape: f32[1,32], index: 6, kind: input, shape index: {}]
  %s7 = inlined_call_operand.vmem [shape: bf16[32,32], index: 7, kind: input, shape index: {}]
  %s8 = inlined_call_operand.vmem [shape: f32[1,32], index: 8, kind: input, shape index: {}]
  %s9 = inlined_call_operand.vmem [shape: f32[1,32], index: 9, kind: input, shape index: {}]
  %s10 = inlined_call_operand.<no memory space> [shape: f32[1,1], index: 10, kind: input, shape index: {}]
  %s11 = inlined_call_operand.vmem [shape: f32[2,1], index: 11, kind: output, shape index: {}]
  %s12 = sld [smem:[#allocation0]]
  $region62: #{tpu_custom_call.1} parent=0
    _
  %s14 = ssub.s32 1, %s12
  %s15 = scalar_select 0, %s14, %s12
  %v16 = vstv %s10
  %17 = vst [vmem:[#allocation3] sm:$0x1] %v16
  // Predicated region
  $region2: #{tpu_custom_call.1} parent=0 // pred_check
    _
  $region3: #{tpu_custom_call.1} parent=0 // pred_check_branch
    %19 = sbr.rel (0) target = $region5
  $region4: #{tpu_custom_call.1} parent=0 // pred_region
    _
  $region5: #{tpu_custom_call.1} parent=0 // pred_fallthru
    _
  // Predicated region
  $region6: #{tpu_custom_call.1} parent=0 // pred_check
    _
  $region7: #{tpu_custom_call.1} parent=0 // pred_check_branch
    %21 = sbr.rel (0) target = $region9
  $region8: #{tpu_custom_call.1} parent=0 // pred_region
    _
  $region9: #{tpu_custom_call.1} parent=0 // pred_fallthru
    _
  // Predicated region
  $region10: #{tpu_custom_call.1} parent=0 // pred_check
    _
  $region11: #{tpu_custom_call.1} parent=0 // pred_check_branch
    %23 = sbr.rel (0) target = $region13
  $region12: #{tpu_custom_call.1} parent=0 // pred_region
    _
  $region13: #{tpu_custom_call.1} parent=0 // pred_fallthru
    _
  // Predicated region
  $region14: #{tpu_custom_call.1} parent=0 // pred_check
    _
  $region15: #{tpu_custom_call.1} parent=0 // pred_check_branch
    %25 = sbr.rel (0) target = $region17
  $region16: #{tpu_custom_call.1} parent=0 // pred_region
    _
  $region17: #{tpu_custom_call.1} parent=0 // pred_fallthru
    _
  // Predicated region
  $region18: #{tpu_custom_call.1} parent=0 // pred_check
    _
  $region19: #{tpu_custom_call.1} parent=0 // pred_check_branch
    %27 = sbr.rel (0) target = $region21
  $region20: #{tpu_custom_call.1} parent=0 // pred_region
    _
  $region21: #{tpu_custom_call.1} parent=0 // pred_fallthru
    _
  // Predicated region
  $region22: #{tpu_custom_call.1} parent=0 // pred_check
    _
  $region23: #{tpu_custom_call.1} parent=0 // pred_check_branch
    %29 = sbr.rel (0) target = $region25
  $region24: #{tpu_custom_call.1} parent=0 // pred_region
    _
  $region25: #{tpu_custom_call.1} parent=0 // pred_fallthru
    _
  // Predicated region
  $region26: #{tpu_custom_call.1} parent=0 // pred_check
    _
  $region27: #{tpu_custom_call.1} parent=0 // pred_check_branch
    %31 = sbr.rel (0) target = $region29
  $region28: #{tpu_custom_call.1} parent=0 // pred_region
    _
  $region29: #{tpu_custom_call.1} parent=0 // pred_fallthru
    _
  // Predicated region
  $region30: #{tpu_custom_call.1} parent=0 // pred_check
    _
  $region31: #{tpu_custom_call.1} parent=0 // pred_check_branch
    %33 = sbr.rel (0) target = $region33
  $region32: #{tpu_custom_call.1} parent=0 // pred_region
    _
  $region33: #{tpu_custom_call.1} parent=0 // pred_fallthru
    _
  // Predicated region
  $region34: #{tpu_custom_call.1} parent=0 // pred_check
    _
  $region35: #{tpu_custom_call.1} parent=0 // pred_check_branch
    %35 = sbr.rel (0) target = $region37
  $region36: #{tpu_custom_call.1} parent=0 // pred_region
    _
  $region37: #{tpu_custom_call.1} parent=0 // pred_fallthru
    _
  // Predicated region
  $region38: #{tpu_custom_call.1} parent=0 // pred_check
    _
  $region39: #{tpu_custom_call.1} parent=0 // pred_check_branch
    %37 = sbr.rel (0) target = $region41
  $region40: #{tpu_custom_call.1} parent=0 // pred_region
    _
  $region41: #{tpu_custom_call.1} parent=0 // pred_fallthru
    _
  // Predicated region
  $region42: #{tpu_custom_call.1} parent=0 // pred_check
    _
  $region43: #{tpu_custom_call.1} parent=0 // pred_check_branch
    %39 = sbr.rel (0) target = $region45
  $region44: #{tpu_custom_call.1} parent=0 // pred_region
    _
  $region45: #{tpu_custom_call.1} parent=0 // pred_fallthru
    _
  %p41 = scmp.eq.s32.totalorder 0, 0
  // Predicated region
  $region46: #{tpu_custom_call.1} parent=0 // pred_check
    %p42 = pneg %p41
  $region47: #{tpu_custom_call.1} parent=0 // pred_check_branch
    %44 = sbr.rel (%p42) target = $region49
  $region48: #{tpu_custom_call.1} parent=0 // pred_region
    %vm45 = vcmask 254976
    %46 = vst.msk [vmem:[#allocation2] sm:$0x3] %vm45, 0.0
  $region49: #{tpu_custom_call.1} parent=0 // pred_fallthru
    _
  %v47 = vld [vmem:[%s4] sm:$0xff]
  %v48 = vld [vmem:[%s4 + $0x8] sm:$0xff]
  %v49 = vld [vmem:[#allocation2] sm:$0x3]
  %vm50 = vcmask 261120
  %v51 = vsel %vm50, %v47, 0.0
  %v52 = vrot.slane %v51, 4
  %v53 = vadd.f32 %v51, %v52
  %v54 = vrot.slane %v53, 2
  %v55 = vadd.f32 %v53, %v54
  %v56 = vrot.slane %v55, 1
  %v57 = vadd.f32 %v55, %v56
  %v58 = vsel %vm50, %v48, 0.0
  %v59 = vrot.slane %v58, 4
  %v60 = vadd.f32 %v58, %v59
  %v61 = vrot.slane %v60, 2
  %v62 = vadd.f32 %v60, %v61
  %v63 = vrot.slane %v62, 1
  %v64 = vadd.f32 %v62, %v63
  %vm67 = vcmask 1041409
  %v68 = vsel %vm67, %v64, %v57
  %v70 = vadd.f32 %v49, %v68
  %vm71 = vcmask 254976
  %72 = vst.msk [vmem:[#allocation2] sm:$0x3] %vm71, %v70
  // Predicated region
  $region50: #{tpu_custom_call.1} parent=0 // pred_check
    %p73 = pneg %p41
  $region51: #{tpu_custom_call.1} parent=0 // pred_check_branch
    %75 = sbr.rel (%p73) target = $region53
  $region52: #{tpu_custom_call.1} parent=0 // pred_region
    %v76 = vld [vmem:[#allocation2] sm:$0x3]
    %v77 = vmul.f32 %v76, 0.125
    %v78 = vpack.c.bf16 %v77, %v77
    %v79 = vld [vmem:[%s0] sm:$0x3]
    %v80 = vpack.c.bf16 %v79, %v79
    %v81 = vld [vmem:[%s1] sm:$0x3]
    %v82 = vpack.c.bf16 %v81, %v81
    %v83 = vld [vmem:[%s2] sm:$0x3]
    %v84 = vpack.c.bf16 %v83, %v83
    %v85 = vld [vmem:[%s3] sm:$0x3]
    %v86 = vpack.c.bf16 %v85, %v85
    %v87 = vld [vmem:[%s6] sm:$0x1]
    %v88 = vld [vmem:[%s5] sm:$0xf]
    %v89 = vld [vmem:[%s5 + $0x4] sm:$0xf]
    %v90 = vld [vmem:[%s5 + $0x8] sm:$0xf]
    %v91 = vld [vmem:[%s5 + $0xc] sm:$0xf]
    %v96 = vunpack.c.l.b16 %v88
    %v97 = vunpack.c.l.b16 %v89
    %v98 = vunpack.c.l.b16 %v90
    %v99 = vunpack.c.l.b16 %v91
    %v100 = vpack.c.b16 %v97, %v96
    %v101 = vpack.c.b16 %v99, %v98
    %v105 = vsel %vm50, %v80, 0
    %107 = vmatprep.subr.bf16.mxu0 0
    %108 = vmatpush1.bf16.msra.mxu0 %v100
    %109 = vmatprep.subr.bf16.mxu0 0
    %110 = vmatpush1.bf16.msra.mxu0 %v101
    %111 = vmatprep.subr.bf16.mxu0 0
    %112 = vmatpush1.bf16.msra.mxu0 0
    %113 = vmatprep.subr.bf16.mxu0 0
    %114 = vmatpush1.bf16.msra.mxu0 0
    %115 = vmatprep.subr.bf16.mxu0 0
    %116 = vmatpush1.bf16.msra.mxu0 0
    %117 = vmatprep.subr.bf16.mxu0 0
    %118 = vmatpush1.bf16.msra.mxu0 0
    %119 = vmatprep.subr.bf16.mxu0 0
    %120 = vmatpush1.bf16.msra.mxu0 0
    %121 = vmatprep.subr.bf16.mxu0 0
    %122 = vmatpush1.bf16.msra.mxu0 0
    %123 = vmatprep.subr.bf16.mxu0 0
    %124 = vmatpush1.bf16.msra.mxu0 0
    %125 = vmatprep.subr.bf16.mxu0 0
    %126 = vmatpush1.bf16.msra.mxu0 0
    %127 = vmatprep.subr.bf16.mxu0 0
    %128 = vmatpush1.bf16.msra.mxu0 0
    %129 = vmatprep.subr.bf16.mxu0 0
    %130 = vmatpush1.bf16.msra.mxu0 0
    %131 = vmatprep.subr.bf16.mxu0 0
    %132 = vmatpush1.bf16.msra.mxu0 0
    %133 = vmatprep.subr.bf16.mxu0 0
    %134 = vmatpush1.bf16.msra.mxu0 0
    %135 = vmatprep.subr.bf16.mxu0 0
    %136 = vmatpush1.bf16.msra.mxu0 0
    %137 = vmatprep.subr.bf16.mxu0 0
    %138 = vmatpush1.bf16.msra.mxu0 0
    %139 = vmatprep.mubr.bf16.mxu0 0
    %140 = vmatmul.mubr.bf16.gmra.mrb[0].mxu0 %v105
    %v141 = vpop.f32.mrb[0].mxu0
    %v142 = vadd.f32 0.0, %v141
    %v143 = vpop.f32.mrb[0].mxu0
    %v144 = vpop.f32.mrb[0].mxu0
    %v145 = vpop.f32.mrb[0].mxu0
    %146 = vdwg.mxu0
    %v148 = vlaneseq
    %v149 = vshrl.u32 %v148, 7
    %v150 = vsub.s32 0, %v149
    %v151 = vrot.slane %v87, %v150
    %v153 = vadd.f32 %v151, %v142
    %v154 = vld [vmem:[%s5 + $0x10] sm:$0xf]
    %v155 = vld [vmem:[%s5 + $0x14] sm:$0xf]
    %v156 = vld [vmem:[%s5 + $0x18] sm:$0xf]
    %v157 = vld [vmem:[%s5 + $0x1c] sm:$0xf]
    %v162 = vunpack.c.l.b16 %v154
    %v163 = vunpack.c.l.b16 %v155
    %v164 = vunpack.c.l.b16 %v156
    %v165 = vunpack.c.l.b16 %v157
    %v166 = vpack.c.b16 %v163, %v162
    %v167 = vpack.c.b16 %v165, %v164
    %v171 = vsel %vm50, %v82, 0
    %173 = vmatprep.subr.bf16.mxu0 0
    %174 = vmatpush1.bf16.msra.mxu0 %v166
    %175 = vmatprep.subr.bf16.mxu0 0
    %176 = vmatpush1.bf16.msra.mxu0 %v167
    %177 = vmatprep.subr.bf16.mxu0 0
    %178 = vmatpush1.bf16.msra.mxu0 0
    %179 = vmatprep.subr.bf16.mxu0 0
    %180 = vmatpush1.bf16.msra.mxu0 0
    %181 = vmatprep.subr.bf16.mxu0 0
    %182 = vmatpush1.bf16.msra.mxu0 0
    %183 = vmatprep.subr.bf16.mxu0 0
    %184 = vmatpush1.bf16.msra.mxu0 0
    %185 = vmatprep.subr.bf16.mxu0 0
    %186 = vmatpush1.bf16.msra.mxu0 0
    %187 = vmatprep.subr.bf16.mxu0 0
    %188 = vmatpush1.bf16.msra.mxu0 0
    %189 = vmatprep.subr.bf16.mxu0 0
    %190 = vmatpush1.bf16.msra.mxu0 0
    %191 = vmatprep.subr.bf16.mxu0 0
    %192 = vmatpush1.bf16.msra.mxu0 0
    %193 = vmatprep.subr.bf16.mxu0 0
    %194 = vmatpush1.bf16.msra.mxu0 0
    %195 = vmatprep.subr.bf16.mxu0 0
    %196 = vmatpush1.bf16.msra.mxu0 0
    %197 = vmatprep.subr.bf16.mxu0 0
    %198 = vmatpush1.bf16.msra.mxu0 0
    %199 = vmatprep.subr.bf16.mxu0 0
    %200 = vmatpush1.bf16.msra.mxu0 0
    %201 = vmatprep.subr.bf16.mxu0 0
    %202 = vmatpush1.bf16.msra.mxu0 0
    %203 = vmatprep.subr.bf16.mxu0 0
    %204 = vmatpush1.bf16.msra.mxu0 0
    %205 = vmatprep.mubr.bf16.mxu0 0
    %206 = vmatmul.mubr.bf16.gmra.mrb[0].mxu0 %v171
    %v207 = vpop.f32.mrb[0].mxu0
    %v208 = vadd.f32 0.0, %v207
    %v209 = vpop.f32.mrb[0].mxu0
    %v210 = vpop.f32.mrb[0].mxu0
    %v211 = vpop.f32.mrb[0].mxu0
    %212 = vdwg.mxu0
    %v213 = vadd.f32 %v153, %v208
    %v214 = vld [vmem:[%s5 + $0x20] sm:$0xf]
    %v215 = vld [vmem:[%s5 + $0x24] sm:$0xf]
    %v216 = vld [vmem:[%s5 + $0x28] sm:$0xf]
    %v217 = vld [vmem:[%s5 + $0x2c] sm:$0xf]
    %v222 = vunpack.c.l.b16 %v214
    %v223 = vunpack.c.l.b16 %v215
    %v224 = vunpack.c.l.b16 %v216
    %v225 = vunpack.c.l.b16 %v217
    %v226 = vpack.c.b16 %v223, %v222
    %v227 = vpack.c.b16 %v225, %v224
    %v231 = vsel %vm50, %v84, 0
    %233 = vmatprep.subr.bf16.mxu0 0
    %234 = vmatpush1.bf16.msra.mxu0 %v226
    %235 = vmatprep.subr.bf16.mxu0 0
    %236 = vmatpush1.bf16.msra.mxu0 %v227
    %237 = vmatprep.subr.bf16.mxu0 0
    %238 = vmatpush1.bf16.msra.mxu0 0
    %239 = vmatprep.subr.bf16.mxu0 0
    %240 = vmatpush1.bf16.msra.mxu0 0
    %241 = vmatprep.subr.bf16.mxu0 0
    %242 = vmatpush1.bf16.msra.mxu0 0
    %243 = vmatprep.subr.bf16.mxu0 0
    %244 = vmatpush1.bf16.msra.mxu0 0
    %245 = vmatprep.subr.bf16.mxu0 0
    %246 = vmatpush1.bf16.msra.mxu0 0
    %247 = vmatprep.subr.bf16.mxu0 0
    %248 = vmatpush1.bf16.msra.mxu0 0
    %249 = vmatprep.subr.bf16.mxu0 0
    %250 = vmatpush1.bf16.msra.mxu0 0
    %251 = vmatprep.subr.bf16.mxu0 0
    %252 = vmatpush1.bf16.msra.mxu0 0
    %253 = vmatprep.subr.bf16.mxu0 0
    %254 = vmatpush1.bf16.msra.mxu0 0
    %255 = vmatprep.subr.bf16.mxu0 0
    %256 = vmatpush1.bf16.msra.mxu0 0
    %257 = vmatprep.subr.bf16.mxu0 0
    %258 = vmatpush1.bf16.msra.mxu0 0
    %259 = vmatprep.subr.bf16.mxu0 0
    %260 = vmatpush1.bf16.msra.mxu0 0
    %261 = vmatprep.subr.bf16.mxu0 0
    %262 = vmatpush1.bf16.msra.mxu0 0
    %263 = vmatprep.subr.bf16.mxu0 0
    %264 = vmatpush1.bf16.msra.mxu0 0
    %265 = vmatprep.mubr.bf16.mxu0 0
    %266 = vmatmul.mubr.bf16.gmra.mrb[0].mxu0 %v231
    %v267 = vpop.f32.mrb[0].mxu0
    %v268 = vadd.f32 0.0, %v267
    %v269 = vpop.f32.mrb[0].mxu0
    %v270 = vpop.f32.mrb[0].mxu0
    %v271 = vpop.f32.mrb[0].mxu0
    %272 = vdwg.mxu0
    %v273 = vadd.f32 %v213, %v268
    %v274 = vld [vmem:[%s5 + $0x30] sm:$0xf]
    %v275 = vld [vmem:[%s5 + $0x34] sm:$0xf]
    %v276 = vld [vmem:[%s5 + $0x38] sm:$0xf]
    %v277 = vld [vmem:[%s5 + $0x3c] sm:$0xf]
    %v282 = vunpack.c.l.b16 %v274
    %v283 = vunpack.c.l.b16 %v275
    %v284 = vunpack.c.l.b16 %v276
    %v285 = vunpack.c.l.b16 %v277
    %v286 = vpack.c.b16 %v283, %v282
    %v287 = vpack.c.b16 %v285, %v284
    %v291 = vsel %vm50, %v86, 0
    %293 = vmatprep.subr.bf16.mxu0 0
    %294 = vmatpush1.bf16.msra.mxu0 %v286
    %295 = vmatprep.subr.bf16.mxu0 0
    %296 = vmatpush1.bf16.msra.mxu0 %v287
    %297 = vmatprep.subr.bf16.mxu0 0
    %298 = vmatpush1.bf16.msra.mxu0 0
    %299 = vmatprep.subr.bf16.mxu0 0
    %300 = vmatpush1.bf16.msra.mxu0 0
    %301 = vmatprep.subr.bf16.mxu0 0
    %302 = vmatpush1.bf16.msra.mxu0 0
    %303 = vmatprep.subr.bf16.mxu0 0
    %304 = vmatpush1.bf16.msra.mxu0 0
    %305 = vmatprep.subr.bf16.mxu0 0
    %306 = vmatpush1.bf16.msra.mxu0 0
    %307 = vmatprep.subr.bf16.mxu0 0
    %308 = vmatpush1.bf16.msra.mxu0 0
    %309 = vmatprep.subr.bf16.mxu0 0
    %310 = vmatpush1.bf16.msra.mxu0 0
    %311 = vmatprep.subr.bf16.mxu0 0
    %312 = vmatpush1.bf16.msra.mxu0 0
    %313 = vmatprep.subr.bf16.mxu0 0
    %314 = vmatpush1.bf16.msra.mxu0 0
    %315 = vmatprep.subr.bf16.mxu0 0
    %316 = vmatpush1.bf16.msra.mxu0 0
    %317 = vmatprep.subr.bf16.mxu0 0
    %318 = vmatpush1.bf16.msra.mxu0 0
    %319 = vmatprep.subr.bf16.mxu0 0
    %320 = vmatpush1.bf16.msra.mxu0 0
    %321 = vmatprep.subr.bf16.mxu0 0
    %322 = vmatpush1.bf16.msra.mxu0 0
    %323 = vmatprep.subr.bf16.mxu0 0
    %324 = vmatpush1.bf16.msra.mxu0 0
    %325 = vmatprep.mubr.bf16.mxu0 0
    %326 = vmatmul.mubr.bf16.gmra.mrb[0].mxu0 %v291
    %v327 = vpop.f32.mrb[0].mxu0
    %v328 = vadd.f32 0.0, %v327
    %v329 = vpop.f32.mrb[0].mxu0
    %v330 = vpop.f32.mrb[0].mxu0
    %v331 = vpop.f32.mrb[0].mxu0
    %332 = vdwg.mxu0
    %v333 = vadd.f32 %v273, %v328
    %v334 = vld [vmem:[%s5 + $0x40] sm:$0xf]
    %v335 = vld [vmem:[%s5 + $0x44] sm:$0xf]
    %v336 = vld [vmem:[%s5 + $0x48] sm:$0xf]
    %v337 = vld [vmem:[%s5 + $0x4c] sm:$0xf]
    %v342 = vunpack.c.l.b16 %v334
    %v343 = vunpack.c.l.b16 %v335
    %v344 = vunpack.c.l.b16 %v336
    %v345 = vunpack.c.l.b16 %v337
    %v346 = vpack.c.b16 %v343, %v342
    %v347 = vpack.c.b16 %v345, %v344
    %v351 = vsel %vm50, %v78, 0
    %353 = vmatprep.subr.bf16.mxu0 0
    %354 = vmatpush1.bf16.msra.mxu0 %v346
    %355 = vmatprep.subr.bf16.mxu0 0
    %356 = vmatpush1.bf16.msra.mxu0 %v347
    %357 = vmatprep.subr.bf16.mxu0 0
    %358 = vmatpush1.bf16.msra.mxu0 0
    %359 = vmatprep.subr.bf16.mxu0 0
    %360 = vmatpush1.bf16.msra.mxu0 0
    %361 = vmatprep.subr.bf16.mxu0 0
    %362 = vmatpush1.bf16.msra.mxu0 0
    %363 = vmatprep.subr.bf16.mxu0 0
    %364 = vmatpush1.bf16.msra.mxu0 0
    %365 = vmatprep.subr.bf16.mxu0 0
    %366 = vmatpush1.bf16.msra.mxu0 0
    %367 = vmatprep.subr.bf16.mxu0 0
    %368 = vmatpush1.bf16.msra.mxu0 0
    %369 = vmatprep.subr.bf16.mxu0 0
    %370 = vmatpush1.bf16.msra.mxu0 0
    %371 = vmatprep.subr.bf16.mxu0 0
    %372 = vmatpush1.bf16.msra.mxu0 0
    %373 = vmatprep.subr.bf16.mxu0 0
    %374 = vmatpush1.bf16.msra.mxu0 0
    %375 = vmatprep.subr.bf16.mxu0 0
    %376 = vmatpush1.bf16.msra.mxu0 0
    %377 = vmatprep.subr.bf16.mxu0 0
    %378 = vmatpush1.bf16.msra.mxu0 0
    %379 = vmatprep.subr.bf16.mxu0 0
    %380 = vmatpush1.bf16.msra.mxu0 0
    %381 = vmatprep.subr.bf16.mxu0 0
    %382 = vmatpush1.bf16.msra.mxu0 0
    %383 = vmatprep.subr.bf16.mxu0 0
    %384 = vmatpush1.bf16.msra.mxu0 0
    %385 = vmatprep.mubr.bf16.mxu0 0
    %386 = vmatmul.mubr.bf16.gmra.mrb[0].mxu0 %v351
    %v387 = vpop.f32.mrb[0].mxu0
    %v388 = vadd.f32 0.0, %v387
    %v389 = vpop.f32.mrb[0].mxu0
    %v390 = vpop.f32.mrb[0].mxu0
    %v391 = vpop.f32.mrb[0].mxu0
    %392 = vdwg.mxu0
    %v393 = vadd.f32 %v333, %v388
    %v394 = vsub.f32 0.0, %v393
    %v395 = vmul.f32 %v394, 1.442695
    %v396 = vpow.pop %v395
    %v397 = vadd.f32 %v396, 1.0
    %v398 = vrcp.pop %v397
    %v399 = vmul.f32 1.0, %v398
    %v400 = vmul.f32 %v393, %v399
    %v401 = vpack.c.bf16 %v400, %v400
    %v402 = vld [vmem:[%s7] sm:$0xf]
    %v403 = vld [vmem:[%s7 + $0x4] sm:$0xf]
    %v404 = vld [vmem:[%s7 + $0x8] sm:$0xf]
    %v405 = vld [vmem:[%s7 + $0xc] sm:$0xf]
    %v406 = vld [vmem:[%s8] sm:$0x1]
    %v408 = vlaneseq
    %v409 = vshrl.u32 %v408, 7
    %v410 = vsub.s32 0, %v409
    %v411 = vrot.slane %v406, %v410
    %v417 = vunpack.c.l.b16 %v402
    %v418 = vunpack.c.l.b16 %v403
    %v419 = vunpack.c.l.b16 %v404
    %v420 = vunpack.c.l.b16 %v405
    %v421 = vpack.c.b16 %v418, %v417
    %v422 = vpack.c.b16 %v420, %v419
    %v426 = vsel %vm50, %v401, 0
    %428 = vmatprep.subr.bf16.mxu0 0
    %429 = vmatpush1.bf16.msra.mxu0 %v421
    %430 = vmatprep.subr.bf16.mxu0 0
    %431 = vmatpush1.bf16.msra.mxu0 %v422
    %432 = vmatprep.subr.bf16.mxu0 0
    %433 = vmatpush1.bf16.msra.mxu0 0
    %434 = vmatprep.subr.bf16.mxu0 0
    %435 = vmatpush1.bf16.msra.mxu0 0
    %436 = vmatprep.subr.bf16.mxu0 0
    %437 = vmatpush1.bf16.msra.mxu0 0
    %438 = vmatprep.subr.bf16.mxu0 0
    %439 = vmatpush1.bf16.msra.mxu0 0
    %440 = vmatprep.subr.bf16.mxu0 0
    %441 = vmatpush1.bf16.msra.mxu0 0
    %442 = vmatprep.subr.bf16.mxu0 0
    %443 = vmatpush1.bf16.msra.mxu0 0
    %444 = vmatprep.subr.bf16.mxu0 0
    %445 = vmatpush1.bf16.msra.mxu0 0
    %446 = vmatprep.subr.bf16.mxu0 0
    %447 = vmatpush1.bf16.msra.mxu0 0
    %448 = vmatprep.subr.bf16.mxu0 0
    %449 = vmatpush1.bf16.msra.mxu0 0
    %450 = vmatprep.subr.bf16.mxu0 0
    %451 = vmatpush1.bf16.msra.mxu0 0
    %452 = vmatprep.subr.bf16.mxu0 0
    %453 = vmatpush1.bf16.msra.mxu0 0
    %454 = vmatprep.subr.bf16.mxu0 0
    %455 = vmatpush1.bf16.msra.mxu0 0
    %456 = vmatprep.subr.bf16.mxu0 0
    %457 = vmatpush1.bf16.msra.mxu0 0
    %458 = vmatprep.subr.bf16.mxu0 0
    %459 = vmatpush1.bf16.msra.mxu0 0
    %460 = vmatprep.mubr.bf16.mxu0 0
    %461 = vmatmul.mubr.bf16.gmra.mrb[0].mxu0 %v426
    %v462 = vpop.f32.mrb[0].mxu0
    %v463 = vadd.f32 %v411, %v462
    %v464 = vpop.f32.mrb[0].mxu0
    %v465 = vpop.f32.mrb[0].mxu0
    %v466 = vpop.f32.mrb[0].mxu0
    %467 = vdwg.mxu0
    %v468 = vsub.f32 0.0, %v463
    %v469 = vmul.f32 %v468, 1.442695
    %v470 = vpow.pop %v469
    %v471 = vadd.f32 %v470, 1.0
    %v472 = vrcp.pop %v471
    %v473 = vmul.f32 1.0, %v472
    %v474 = vmul.f32 %v463, %v473
    %v475 = vld [vmem:[%s9] sm:$0x1]
    %v477 = vlaneseq
    %v478 = vshrl.u32 %v477, 7
    %v479 = vsub.s32 0, %v478
    %v480 = vrot.slane %v475, %v479
    %v482 = vmul.f32 %v474, %v480
    %v483 = vsel %vm71, %v482, 0.0
    %484 = vadd.xlane.f32.xlu0 %v483
    %v485 = vpop.xlane.xlu0 %484
    %v486 = vld [vmem:[#allocation3] sm:$0x1]
    %v488 = vlaneseq
    %v489 = vshrl.u32 %v488, 7
    %v490 = vsub.s32 0, %v489
    %v491 = vrot.slane %v486, %v490
    %v493 = vadd.f32 %v485, %v491
    %vm494 = vcmask 1024
    %495 = vst.msk [vmem:[%s11] sm:$0x3] %vm494, %v493
  $region53: #{tpu_custom_call.1} parent=0 // pred_fallthru
    _
  // Predicated region
  $region54: #{tpu_custom_call.1} parent=0 // pred_check
    _
  $region55: #{tpu_custom_call.1} parent=0 // pred_check_branch
    %497 = sbr.rel (0) target = $region57
  $region56: #{tpu_custom_call.1} parent=0 // pred_region
    _
  $region57: #{tpu_custom_call.1} parent=0 // pred_fallthru
    _
  // Predicated region
  $region58: #{tpu_custom_call.1} parent=0 // pred_check
    _
  $region59: #{tpu_custom_call.1} parent=0 // pred_check_branch
    %499 = sbr.rel (0) target = $region61
  $region60: #{tpu_custom_call.1} parent=0 // pred_region
    _
  $region61: #{tpu_custom_call.1} parent=0 // pred_fallthru
    _

</llo_original>
